<compile_context>
chip_gen: v7x
topology: tpu7x:2x2x1
jax: 0.10.0
libtpu: 0.0.40
codegen_flags: <defaults>
</compile_context>

<pallas_src>
import numpy as np
import jax
import jax.numpy as jnp
from jax.experimental import pallas as pl
from jax.experimental.pallas import tpu as pltpu


DIM = 128          # embedding dim (512 in the real model, shrunk for the demo)
HIDDEN = 256       # MLP hidden width
ENC = 256          # Fourier feature width per scale (cos+sin)
SIGMAS = (2.0 ** 0, 2.0 ** 4, 2.0 ** 8)

_VMEM_LIMIT = 48 * 1024 * 1024   # safe on v5e/v6e (128 MiB) and v7x (64 MiB)


def _round_up(x, m):
    return (x + m - 1) // m * m


# -----------------------------------------------------------------------------
# Kernel 1: two-layer MLP  y = relu(x @ W1 + b1) @ W2 + b2
#   grid = (row tiles, K tiles); hidden activation accumulated in VMEM f32.
# -----------------------------------------------------------------------------
def _mlp2_kernel(x_ref, w1_ref, b1_ref, w2_ref, b2_ref, o_ref, h_acc):
    k = pl.program_id(1)

    @pl.when(k == 0)
    def _():
        h_acc[...] = jnp.zeros_like(h_acc)

    # bf16 MXU matmul, f32 accumulation.
    h_acc[...] += jnp.dot(
        x_ref[...].astype(jnp.bfloat16),
        w1_ref[...].astype(jnp.bfloat16),
        preferred_element_type=jnp.float32,
    )

    @pl.when(k == pl.num_programs(1) - 1)
    def _():
        h = jnp.maximum(h_acc[...] + b1_ref[...], 0.0)
        y = jnp.dot(
            h.astype(jnp.bfloat16),
            w2_ref[...].astype(jnp.bfloat16),
            preferred_element_type=jnp.float32,
        ) + b2_ref[...]
        o_ref[...] = y.astype(o_ref.dtype)


def mlp2(x, w1, b1, w2, b2, *, tm=256, tk=512):
    """x: [B, K] (any float dtype), w1: [K, H] bf16, w2: [H, D] bf16."""
    B, K = x.shape
    H_ = w1.shape[1]
    D_ = w2.shape[1]

    tm = min(tm, _round_up(B, 8))
    tk = min(tk, _round_up(K, 128))
    B_pad = _round_up(B, tm)
    K_pad = _round_up(K, tk)

    if B_pad != B or K_pad != K:
        x = jnp.pad(x, ((0, B_pad - B), (0, K_pad - K)))
    if K_pad != K:
        w1 = jnp.pad(w1, ((0, K_pad - K), (0, 0)))

    out = pl.pallas_call(
        _mlp2_kernel,
        out_shape=jax.ShapeDtypeStruct((B_pad, D_), jnp.float32),
        grid_spec=pltpu.PrefetchScalarGridSpec(
            num_scalar_prefetch=0,
            grid=(B_pad // tm, K_pad // tk),
            in_specs=[
                pl.BlockSpec((tm, tk), lambda i, k: (i, k)),
                pl.BlockSpec((tk, H_), lambda i, k: (k, 0)),
                pl.BlockSpec((1, H_), lambda i, k: (0, 0)),
                pl.BlockSpec((H_, D_), lambda i, k: (0, 0)),
                pl.BlockSpec((1, D_), lambda i, k: (0, 0)),
            ],
            out_specs=pl.BlockSpec((tm, D_), lambda i, k: (i, 0)),
            scratch_shapes=[pltpu.VMEM((tm, H_), jnp.float32)],
        ),
        compiler_params=pltpu.CompilerParams(
            dimension_semantics=("parallel", "arbitrary"),
            vmem_limit_bytes=_VMEM_LIMIT,
        ),
    )(x, w1, b1.reshape(1, -1), w2, b2.reshape(1, -1))
    return out[:B]


# -----------------------------------------------------------------------------
# Kernel 2: fused location encoder.
#   For each scale s: ff = [cos, sin](2*pi * proj @ freq_s); out += MLP_s(ff).
#   grid = (L tiles, scales); [tl, DIM] accumulator resident across scales.
#   The summed features are L2-normalized in-kernel on the last scale
#   (equivalent to F.normalize(..., eps=1e-12) in the PyTorch forward).
# -----------------------------------------------------------------------------
def _loc_encoder_kernel(proj_ref, freq_ref, w1_ref, b1_ref, w2_ref, b2_ref,
                        o_ref, acc_ref):
    s = pl.program_id(1)

    @pl.when(s == 0)
    def _():
        acc_ref[...] = jnp.zeros_like(acc_ref)

    proj = proj_ref[...]                       # [tl, 2] f32
    freq = freq_ref[0]                         # [2, F]  f32 (keep angles exact)
    ang = jnp.float32(2.0 * np.pi) * (
        proj[:, 0:1] * freq[0:1, :] + proj[:, 1:2] * freq[1:2, :])  # [tl, F]
    ff = jnp.concatenate([jnp.cos(ang), jnp.sin(ang)], axis=1)      # [tl, ENC]

    h = jnp.dot(ff.astype(jnp.bfloat16), w1_ref[0],
                preferred_element_type=jnp.float32) + b1_ref[0]
    h = jnp.maximum(h, 0.0)
    acc_ref[...] += jnp.dot(h.astype(jnp.bfloat16), w2_ref[0],
                            preferred_element_type=jnp.float32) + b2_ref[0]

    @pl.when(s == pl.num_programs(1) - 1)
    def _():
        feats = acc_ref[...]
        # rsqrt on EUP; eps^2 clamp of sum-of-squares == F.normalize eps=1e-12.
        inv = jax.lax.rsqrt(jnp.maximum(
            jnp.sum(feats * feats, axis=1, keepdims=True), jnp.float32(1e-24)))
        o_ref[...] = feats * inv


def location_encoder(params, latlon_deg, *, tl=256):
    proj = equal_earth_projection(latlon_deg)          # [L, 2] f32
    L = proj.shape[0]
    tl = min(tl, _round_up(L, 8))
    L_pad = _round_up(L, tl)
    if L_pad != L:
        proj = jnp.pad(proj, ((0, L_pad - L), (0, 0)))

    loc = params["loc"]
    S = loc["freq"].shape[0]
    F_ = loc["freq"].shape[2]
    ENC_ = loc["w1"].shape[1]
    HID_ = loc["w1"].shape[2]
    D_ = loc["w2"].shape[2]

    feats = pl.pallas_call(
        _loc_encoder_kernel,
        out_shape=jax.ShapeDtypeStruct((L_pad, D_), jnp.float32),
        grid_spec=pltpu.PrefetchScalarGridSpec(
            num_scalar_prefetch=0,
            grid=(L_pad // tl, S),
            in_specs=[
                pl.BlockSpec((tl, 2), lambda i, s: (i, 0)),
                pl.BlockSpec((1, 2, F_), lambda i, s: (s, 0, 0)),
                pl.BlockSpec((1, ENC_, HID_), lambda i, s: (s, 0, 0)),
                pl.BlockSpec((1, 1, HID_), lambda i, s: (s, 0, 0)),
                pl.BlockSpec((1, HID_, D_), lambda i, s: (s, 0, 0)),
                pl.BlockSpec((1, 1, D_), lambda i, s: (s, 0, 0)),
            ],
            out_specs=pl.BlockSpec((tl, D_), lambda i, s: (i, 0)),
            scratch_shapes=[pltpu.VMEM((tl, D_), jnp.float32)],
        ),
        compiler_params=pltpu.CompilerParams(
            dimension_semantics=("parallel", "arbitrary"),
            vmem_limit_bytes=_VMEM_LIMIT,
        ),
    )(proj, loc["freq"], loc["w1"], loc["b1"], loc["w2"], loc["b2"])
    return feats[:L]          # L2-normalized location features [L, DIM]


# -----------------------------------------------------------------------------
# Kernel 3: CLIP head.
#   logits = exp(logit_scale) * normalize(img) @ loc_n^T
#   loc_n arrives pre-normalized (kernel 2) and transposed to [DIM, L] so the
#   matmul contracts the sublane axis of the RHS (no in-kernel transpose).
#   grid = (B tiles, L tiles); output tile is lane-dense (multiple of 128).
# -----------------------------------------------------------------------------
def _clip_head_kernel(scale_ref, img_ref, loct_ref, o_ref):
    img = img_ref[...].astype(jnp.float32)          # [tb, DIM]
    inv = jax.lax.rsqrt(jnp.maximum(
        jnp.sum(img * img, axis=1, keepdims=True), jnp.float32(1e-24)))
    # fold exp(logit_scale) into the per-row normalization (O(B*DIM) work).
    img_n = (img * (inv * scale_ref[0])).astype(jnp.bfloat16)
    o_ref[...] = jnp.dot(img_n, loct_ref[...],
                         preferred_element_type=jnp.float32)


def clip_head(image_features, location_features_n, logit_scale, *, tb=256, tn=256):
    """image_features: [B, DIM] (un-normalized);
       location_features_n: [L, DIM] (already L2-normalized)."""
    B, D_ = image_features.shape
    L = location_features_n.shape[0]

    tb = min(tb, _round_up(B, 8))
    tn = min(tn, _round_up(L, 128))     # lane-dense output tile
    B_pad = _round_up(B, tb)
    L_pad = _round_up(L, tn)

    img = image_features
    if B_pad != B:
        img = jnp.pad(img, ((0, B_pad - B), (0, 0)))
    loc = location_features_n
    if L_pad != L:
        loc = jnp.pad(loc, ((0, L_pad - L), (0, 0)))
    loc_t = loc.T.astype(jnp.bfloat16)              # [DIM, L_pad]

    scale = jnp.exp(logit_scale).reshape(1).astype(jnp.float32)

    logits = pl.pallas_call(
        _clip_head_kernel,
        out_shape=jax.ShapeDtypeStruct((B_pad, L_pad), jnp.float32),
        grid_spec=pltpu.PrefetchScalarGridSpec(
            num_scalar_prefetch=1,                  # exp(logit_scale) in SMEM
            grid=(B_pad // tb, L_pad // tn),
            in_specs=[
                pl.BlockSpec((tb, D_), lambda i, j, s: (i, 0)),
                pl.BlockSpec((D_, tn), lambda i, j, s: (0, j)),
            ],
            out_specs=pl.BlockSpec((tb, tn), lambda i, j, s: (i, j)),
        ),
        compiler_params=pltpu.CompilerParams(
            dimension_semantics=("parallel", "parallel"),
            vmem_limit_bytes=_VMEM_LIMIT,
        ),
    )(scale, img, loc_t)
    return logits[:B, :L]


# -----------------------------------------------------------------------------
# Glue: projection, params, encoders, forward
# -----------------------------------------------------------------------------
def equal_earth_projection(latlon_deg):
    """Equal Earth projection of (lat, lon) in degrees -> scaled (x, y)."""
    A1, A2, A3, A4 = 1.340264, -0.081106, 0.000893, 0.003796
    SF = 66.50336
    lat = jnp.deg2rad(latlon_deg[:, 0])
    lon = jnp.deg2rad(latlon_deg[:, 1])
    theta = jnp.arcsin(jnp.sqrt(3.0) / 2.0 * jnp.sin(lat))
    t2 = theta * theta
    t6 = t2 * t2 * t2
    x = (2.0 * jnp.sqrt(3.0) * lon * jnp.cos(theta)) / (
        3.0 * (9.0 * A4 * t6 * t2 + 7.0 * A3 * t6 + 3.0 * A2 * t2 + A1))
    y = theta * (A4 * t6 * t2 + A3 * t6 + A2 * t2 + A1)
    return jnp.stack([x, y], axis=1) * (SF / 180.0)


def init_params(key, in_dim):
    ks = jax.random.split(key, 8)
    p = {}
    # image encoder MLP head: in_dim -> HIDDEN -> DIM (weights stored bf16)
    p["img_w1"] = (jax.random.normal(ks[0], (in_dim, HIDDEN), jnp.float32)
                   * 0.02).astype(jnp.bfloat16)
    p["img_b1"] = jnp.zeros((HIDDEN,), jnp.float32)
    p["img_w2"] = (jax.random.normal(ks[1], (HIDDEN, DIM), jnp.float32)
                   * 0.02).astype(jnp.bfloat16)
    p["img_b2"] = jnp.zeros((DIM,), jnp.float32)
    # location encoder: stacked per-scale Fourier freqs + MLPs (ENC->HIDDEN->DIM)
    S = len(SIGMAS)
    sig = jnp.asarray(SIGMAS, jnp.float32).reshape(S, 1, 1)
    p["loc"] = {
        "freq": jax.random.normal(ks[2], (S, 2, ENC // 2), jnp.float32) * sig,
        "w1": (jax.random.normal(ks[3], (S, ENC, HIDDEN), jnp.float32)
               * 0.02).astype(jnp.bfloat16),
        "b1": jnp.zeros((S, 1, HIDDEN), jnp.float32),
        "w2": (jax.random.normal(ks[4], (S, HIDDEN, DIM), jnp.float32)
               * 0.02).astype(jnp.bfloat16),
        "b2": jnp.zeros((S, 1, DIM), jnp.float32),
    }
    # logit_scale, same init as nn.Parameter(ones([]) * log(1/0.07))
    p["logit_scale"] = jnp.array(np.log(1.0 / 0.07), jnp.float32)
    return p


def image_encoder(params, image_nchw):
    B = image_nchw.shape[0]
    # TODO(synk): frozen CLIP ViT backbone not defined in the module; use
    # flatten -> trainable MLP head.
    x = image_nchw.reshape(B, -1).astype(jnp.bfloat16)
    return mlp2(x, params["img_w1"], params["img_b1"],
                params["img_w2"], params["img_b2"])


def geoclip_forward(params, image, location):
    image_features = image_encoder(params, image)              # [B, DIM]
    location_features = location_encoder(params, location)     # [L, DIM], L2-normalized
    logits_per_image = clip_head(image_features, location_features,
                                 params["logit_scale"])         # [B, L]
    # TODO(synk): at large B, emit logits_per_location as a second kernel
    # output with a swapped index_map instead of a full XLA transpose.
    logits_per_location = logits_per_image.T                    # [L, B]
    return logits_per_image, logits_per_location


# -----------------------------------------------------------------------------
if __name__ == "__main__":
    key = jax.random.PRNGKey(0)
    k_img, k_loc, k_par = jax.random.split(key, 3)

    B, C, H, W = 2, 4, 16, 16          # small image batch (NCHW)
    L = 8                              # small GPS gallery

    image = jax.random.normal(k_img, (B, C, H, W), jnp.float32)
    # lat in [-90, 90], lon in [-180, 180]
    u = jax.random.uniform(k_loc, (L, 2), jnp.float32)
    location = jnp.stack([u[:, 0] * 180.0 - 90.0,
                          u[:, 1] * 360.0 - 180.0], axis=1)

    params = init_params(k_par, C * H * W)

    forward = jax.jit(geoclip_forward)
    logits_per_image, logits_per_location = forward(params, image, location)
    jax.block_until_ready((logits_per_image, logits_per_location))

    assert logits_per_image.shape == (B, L)
    assert logits_per_location.shape == (L, B)
    assert bool(jnp.all(jnp.isfinite(logits_per_image)))
    print("KERNEL_OK")
</pallas_src>

<mosaic_0001>
module attributes {stable_mosaic.version = 11 : i64} {
  func.func @_loc_encoder_kernel(%arg0: i32, %arg1: i32, %arg2: memref<8x2xf32, #tpu.memory_space<vmem>>, %arg3: memref<1x2x128xf32, #tpu.memory_space<vmem>>, %arg4: memref<1x256x256xbf16, #tpu.memory_space<vmem>>, %arg5: memref<1x1x256xf32, #tpu.memory_space<vmem>>, %arg6: memref<1x256x128xbf16, #tpu.memory_space<vmem>>, %arg7: memref<1x1x128xf32, #tpu.memory_space<vmem>>, %arg8: memref<8x128xf32, #tpu.memory_space<vmem>>, %arg9: memref<8x128xf32, #tpu.memory_space<vmem>>) attributes {dimension_semantics = [#tpu.dimension_semantics<parallel>, #tpu.dimension_semantics<arbitrary>], iteration_bounds = array<i64: 1, 3>, scalar_prefetch = 0 : i64, scratch_operands = 1 : i64, tpu.core_type = #tpu.core_type<tc>, window_params = [{transform_indices = @transform_0, window_bounds = array<i64: 8, 2>}, {transform_indices = @transform_1, window_bounds = array<i64: 1, 2, 128>}, {transform_indices = @transform_2, window_bounds = array<i64: 1, 256, 256>}, {transform_indices = @transform_3, window_bounds = array<i64: 1, 1, 256>}, {transform_indices = @transform_4, window_bounds = array<i64: 1, 256, 128>}, {transform_indices = @transform_5, window_bounds = array<i64: 1, 1, 128>}, {transform_indices = @transform_6, window_bounds = array<i64: 8, 128>}]} {
    %c0_i32 = arith.constant 0 : i32
    %0 = arith.cmpi eq, %arg1, %c0_i32 : i32
    %1 = arith.extui %0 : i1 to i32
    %c0_i32_0 = arith.constant 0 : i32
    %2 = arith.cmpi ne, %1, %c0_i32_0 : i32
    scf.if %2 {
      %cst_25 = arith.constant 0.000000e+00 : f32
      %46 = vector.broadcast %cst_25 : f32 to vector<8x128xf32>
      %c0_26 = arith.constant 0 : index
      %c0_27 = arith.constant 0 : index
      %47 = vector.load %arg9[%c0_26, %c0_27] : memref<8x128xf32, #tpu.memory_space<vmem>>, vector<8x128xf32>
      tpu.vector_store %arg9[%c0_26, %c0_27], %46 {strides = array<i32>} : memref<8x128xf32, #tpu.memory_space<vmem>>, vector<8x128xf32>,
    } else {
    }
    %c0 = arith.constant 0 : index
    %c0_1 = arith.constant 0 : index
    %3 = vector.load %arg2[%c0, %c0_1] : memref<8x2xf32, #tpu.memory_space<vmem>>, vector<8x2xf32>
    %c0_2 = arith.constant 0 : index
    %c0_3 = arith.constant 0 : index
    %c0_4 = arith.constant 0 : index
    %4 = vector.load %arg3[%c0_2, %c0_3, %c0_4] : memref<1x2x128xf32, #tpu.memory_space<vmem>>, vector<1x2x128xf32>
    %5 = vector.shape_cast %4 : vector<1x2x128xf32> to vector<2x128xf32>
    %6 = vector.extract_strided_slice %3 {offsets = [0, 0], sizes = [8, 1], strides = [1, 1]} : vector<8x2xf32> to vector<8x1xf32>
    %7 = vector.extract_strided_slice %5 {offsets = [0, 0], sizes = [1, 128], strides = [1, 1]} : vector<2x128xf32> to vector<1x128xf32>
    %8 = vector.broadcast %6 : vector<8x1xf32> to vector<8x128xf32>
    %9 = vector.broadcast %7 : vector<1x128xf32> to vector<8x128xf32>
    %10 = arith.mulf %8, %9 : vector<8x128xf32>
    %11 = vector.extract_strided_slice %3 {offsets = [0, 1], sizes = [8, 1], strides = [1, 1]} : vector<8x2xf32> to vector<8x1xf32>
    %12 = vector.extract_strided_slice %5 {offsets = [1, 0], sizes = [1, 128], strides = [1, 1]} : vector<2x128xf32> to vector<1x128xf32>
    %13 = vector.broadcast %11 : vector<8x1xf32> to vector<8x128xf32>
    %14 = vector.broadcast %12 : vector<1x128xf32> to vector<8x128xf32>
    %15 = arith.mulf %13, %14 : vector<8x128xf32>
    %16 = arith.addf %10, %15 : vector<8x128xf32>
    %cst = arith.constant 6.28318548 : f32
    %17 = vector.broadcast %cst : f32 to vector<8x128xf32>
    %18 = arith.mulf %17, %16 : vector<8x128xf32>
    %19 = math.cos %18 : vector<8x128xf32>
    %20 = math.sin %18 : vector<8x128xf32>
    %21 = tpu.concatenate %19, %20 in 1 : vector<8x128xf32>, vector<8x128xf32> -> vector<8x256xf32>
    %22 = arith.truncf %21 : vector<8x256xf32> to vector<8x256xbf16>
    %c0_5 = arith.constant 0 : index
    %c0_6 = arith.constant 0 : index
    %c0_7 = arith.constant 0 : index
    %23 = vector.load %arg4[%c0_5, %c0_6, %c0_7] : memref<1x256x256xbf16, #tpu.memory_space<vmem>>, vector<1x256x256xbf16>
    %24 = vector.shape_cast %23 : vector<1x256x256xbf16> to vector<256x256xbf16>
    %cst_8 = arith.constant dense<0.000000e+00> : vector<8x256xf32>
    %25 = tpu.matmul %22, %24, %cst_8 {dimension_numbers = #tpu.dot_dimension_numbers<[1], [0], [0], [1], [0, 0, 1, 1], [], []>} : vector<8x256xbf16>, vector<256x256xbf16>, vector<8x256xf32> -> vector<8x256xf32>
    %c0_9 = arith.constant 0 : index
    %c0_10 = arith.constant 0 : index
    %c0_11 = arith.constant 0 : index
    %26 = vector.load %arg5[%c0_9, %c0_10, %c0_11] : memref<1x1x256xf32, #tpu.memory_space<vmem>>, vector<1x1x256xf32>
    %27 = vector.shape_cast %26 : vector<1x1x256xf32> to vector<1x256xf32>
    %28 = vector.broadcast %27 : vector<1x256xf32> to vector<8x256xf32>
    %29 = arith.addf %25, %28 : vector<8x256xf32>
    %cst_12 = arith.constant 0.000000e+00 : f32
    %30 = vector.broadcast %cst_12 : f32 to vector<8x256xf32>
    %31 = arith.maximumf %29, %30 : vector<8x256xf32>
    %c0_13 = arith.constant 0 : index
    %c0_14 = arith.constant 0 : index
    %32 = vector.load %arg9[%c0_13, %c0_14] : memref<8x128xf32, #tpu.memory_space<vmem>>, vector<8x128xf32>
    %33 = arith.truncf %31 : vector<8x256xf32> to vector<8x256xbf16>
    %c0_15 = arith.constant 0 : index
    %c0_16 = arith.constant 0 : index
    %c0_17 = arith.constant 0 : index
    %34 = vector.load %arg6[%c0_15, %c0_16, %c0_17] : memref<1x256x128xbf16, #tpu.memory_space<vmem>>, vector<1x256x128xbf16>
    %35 = vector.shape_cast %34 : vector<1x256x128xbf16> to vector<256x128xbf16>
    %cst_18 = arith.constant dense<0.000000e+00> : vector<8x128xf32>
    %36 = tpu.matmul %33, %35, %cst_18 {dimension_numbers = #tpu.dot_dimension_numbers<[1], [0], [0], [1], [0, 0, 1, 1], [], []>} : vector<8x256xbf16>, vector<256x128xbf16>, vector<8x128xf32> -> vector<8x128xf32>
    %c0_19 = arith.constant 0 : index
    %c0_20 = arith.constant 0 : index
    %c0_21 = arith.constant 0 : index
    %37 = vector.load %arg7[%c0_19, %c0_20, %c0_21] : memref<1x1x128xf32, #tpu.memory_space<vmem>>, vector<1x1x128xf32>
    %38 = vector.shape_cast %37 : vector<1x1x128xf32> to vector<1x128xf32>
    %39 = vector.broadcast %38 : vector<1x128xf32> to vector<8x128xf32>
    %40 = arith.addf %36, %39 : vector<8x128xf32>
    %41 = arith.addf %32, %40 : vector<8x128xf32>
    %c0_22 = arith.constant 0 : index
    %c0_23 = arith.constant 0 : index
    %42 = vector.load %arg9[%c0_22, %c0_23] : memref<8x128xf32, #tpu.memory_space<vmem>>, vector<8x128xf32>
    tpu.vector_store %arg9[%c0_22, %c0_23], %41 {strides = array<i32>} : memref<8x128xf32, #tpu.memory_space<vmem>>, vector<8x128xf32>,
    %c2_i32 = arith.constant 2 : i32
    %43 = arith.cmpi eq, %arg1, %c2_i32 : i32
    %44 = arith.extui %43 : i1 to i32
    %c0_i32_24 = arith.constant 0 : i32
    %45 = arith.cmpi ne, %44, %c0_i32_24 : i32
    scf.if %45 {
      %c0_25 = arith.constant 0 : index
      %c0_26 = arith.constant 0 : index
      %46 = vector.load %arg9[%c0_25, %c0_26] : memref<8x128xf32, #tpu.memory_space<vmem>>, vector<8x128xf32>
      %47 = arith.mulf %46, %46 : vector<8x128xf32>
      %cst_27 = arith.constant dense<0.000000e+00> : vector<8xf32>
      %48 = vector.multi_reduction <add>, %47, %cst_27 [1] : vector<8x128xf32> to vector<8xf32>
      %49 = vector.shape_cast %48 : vector<8xf32> to vector<8x1xf32>
      %cst_28 = arith.constant 1.000000e-24 : f32
      %50 = vector.broadcast %cst_28 : f32 to vector<8x1xf32>
      %51 = arith.maximumf %49, %50 : vector<8x1xf32>
      %52 = math.rsqrt %51 : vector<8x1xf32>
      %53 = vector.broadcast %52 : vector<8x1xf32> to vector<8x128xf32>
      %54 = arith.mulf %46, %53 : vector<8x128xf32>
      %c0_29 = arith.constant 0 : index
      %c0_30 = arith.constant 0 : index
      %55 = vector.load %arg8[%c0_29, %c0_30] : memref<8x128xf32, #tpu.memory_space<vmem>>, vector<8x128xf32>
      tpu.vector_store %arg8[%c0_29, %c0_30], %54 {strides = array<i32>} : memref<8x128xf32, #tpu.memory_space<vmem>>, vector<8x128xf32>,
    } else {
    }
    return
  }
  func.func @transform_0(%arg0: i32, %arg1: i32) -> (i32, i32) {
    %c0_i32 = arith.constant 0 : i32
    %c0_i32_0 = arith.constant 0 : i32
    return %arg0, %c0_i32 : i32, i32
  }
  func.func @transform_1(%arg0: i32, %arg1: i32) -> (i32, i32, i32) {
    %c0_i32 = arith.constant 0 : i32
    %c0_i32_0 = arith.constant 0 : i32
    %c0_i32_1 = arith.constant 0 : i32
    return %arg1, %c0_i32, %c0_i32_0 : i32, i32, i32
  }
  func.func @transform_2(%arg0: i32, %arg1: i32) -> (i32, i32, i32) {
    %c0_i32 = arith.constant 0 : i32
    %c0_i32_0 = arith.constant 0 : i32
    %c0_i32_1 = arith.constant 0 : i32
    return %arg1, %c0_i32, %c0_i32_0 : i32, i32, i32
  }
  func.func @transform_3(%arg0: i32, %arg1: i32) -> (i32, i32, i32) {
    %c0_i32 = arith.constant 0 : i32
    %c0_i32_0 = arith.constant 0 : i32
    %c0_i32_1 = arith.constant 0 : i32
    return %arg1, %c0_i32, %c0_i32_0 : i32, i32, i32
  }
  func.func @transform_4(%arg0: i32, %arg1: i32) -> (i32, i32, i32) {
    %c0_i32 = arith.constant 0 : i32
    %c0_i32_0 = arith.constant 0 : i32
    %c0_i32_1 = arith.constant 0 : i32
    return %arg1, %c0_i32, %c0_i32_0 : i32, i32, i32
  }
  func.func @transform_5(%arg0: i32, %arg1: i32) -> (i32, i32, i32) {
    %c0_i32 = arith.constant 0 : i32
    %c0_i32_0 = arith.constant 0 : i32
    %c0_i32_1 = arith.constant 0 : i32
    return %arg1, %c0_i32, %c0_i32_0 : i32, i32, i32
  }
  func.func @transform_6(%arg0: i32, %arg1: i32) -> (i32, i32) {
    %c0_i32 = arith.constant 0 : i32
    %c0_i32_0 = arith.constant 0 : i32
    return %arg0, %c0_i32 : i32, i32
  }
}

module attributes {stable_mosaic.version = 11 : i64} {
  func.func @_mlp2_kernel(%arg0: i32, %arg1: i32, %arg2: memref<8x512xbf16, #tpu.memory_space<vmem>>, %arg3: memref<512x256xbf16, #tpu.memory_space<vmem>>, %arg4: memref<1x256xf32, #tpu.memory_space<vmem>>, %arg5: memref<256x128xbf16, #tpu.memory_space<vmem>>, %arg6: memref<1x128xf32, #tpu.memory_space<vmem>>, %arg7: memref<8x128xf32, #tpu.memory_space<vmem>>, %arg8: memref<8x256xf32, #tpu.memory_space<vmem>>) attributes {dimension_semantics = [#tpu.dimension_semantics<parallel>, #tpu.dimension_semantics<arbitrary>], iteration_bounds = array<i64: 1, 2>, scalar_prefetch = 0 : i64, scratch_operands = 1 : i64, tpu.core_type = #tpu.core_type<tc>, window_params = [{transform_indices = @transform_0, window_bounds = array<i64: 8, 512>}, {transform_indices = @transform_1, window_bounds = array<i64: 512, 256>}, {pipeline_mode = #tpu.pipeline_mode<synchronous>, transform_indices = @transform_2, window_bounds = array<i64: 1, 256>}, {pipeline_mode = #tpu.pipeline_mode<synchronous>, transform_indices = @transform_3, window_bounds = array<i64: 256, 128>}, {pipeline_mode = #tpu.pipeline_mode<synchronous>, transform_indices = @transform_4, window_bounds = array<i64: 1, 128>}, {transform_indices = @transform_5, window_bounds = array<i64: 8, 128>}]} {
    %c0_i32 = arith.constant 0 : i32
    %0 = arith.cmpi eq, %arg1, %c0_i32 : i32
    %1 = arith.extui %0 : i1 to i32
    %c0_i32_0 = arith.constant 0 : i32
    %2 = arith.cmpi ne, %1, %c0_i32_0 : i32
    scf.if %2 {
      %cst_9 = arith.constant 0.000000e+00 : f32
      %12 = vector.broadcast %cst_9 : f32 to vector<8x256xf32>
      %c0_10 = arith.constant 0 : index
      %c0_11 = arith.constant 0 : index
      %13 = vector.load %arg8[%c0_10, %c0_11] : memref<8x256xf32, #tpu.memory_space<vmem>>, vector<8x256xf32>
      tpu.vector_store %arg8[%c0_10, %c0_11], %12 {strides = array<i32>} : memref<8x256xf32, #tpu.memory_space<vmem>>, vector<8x256xf32>,
    } else {
    }
    %c0 = arith.constant 0 : index
    %c0_1 = arith.constant 0 : index
    %3 = vector.load %arg8[%c0, %c0_1] : memref<8x256xf32, #tpu.memory_space<vmem>>, vector<8x256xf32>
    %c0_2 = arith.constant 0 : index
    %c0_3 = arith.constant 0 : index
    %4 = vector.load %arg2[%c0_2, %c0_3] : memref<8x512xbf16, #tpu.memory_space<vmem>>, vector<8x512xbf16>
    %c0_4 = arith.constant 0 : index
    %c0_5 = arith.constant 0 : index
    %5 = vector.load %arg3[%c0_4, %c0_5] : memref<512x256xbf16, #tpu.memory_space<vmem>>, vector<512x256xbf16>
    %cst = arith.constant dense<0.000000e+00> : vector<8x256xf32>
    %6 = tpu.matmul %4, %5, %cst {dimension_numbers = #tpu.dot_dimension_numbers<[1], [0], [0], [1], [0, 0, 1, 1], [], []>} : vector<8x512xbf16>, vector<512x256xbf16>, vector<8x256xf32> -> vector<8x256xf32>
    %7 = arith.addf %3, %6 : vector<8x256xf32>
    %c0_6 = arith.constant 0 : index
    %c0_7 = arith.constant 0 : index
    %8 = vector.load %arg8[%c0_6, %c0_7] : memref<8x256xf32, #tpu.memory_space<vmem>>, vector<8x256xf32>
    tpu.vector_store %arg8[%c0_6, %c0_7], %7 {strides = array<i32>} : memref<8x256xf32, #tpu.memory_space<vmem>>, vector<8x256xf32>,
    %c1_i32 = arith.constant 1 : i32
    %9 = arith.cmpi eq, %arg1, %c1_i32 : i32
    %10 = arith.extui %9 : i1 to i32
    %c0_i32_8 = arith.constant 0 : i32
    %11 = arith.cmpi ne, %10, %c0_i32_8 : i32
    scf.if %11 {
      %c0_9 = arith.constant 0 : index
      %c0_10 = arith.constant 0 : index
      %12 = vector.load %arg8[%c0_9, %c0_10] : memref<8x256xf32, #tpu.memory_space<vmem>>, vector<8x256xf32>
      %c0_11 = arith.constant 0 : index
      %c0_12 = arith.constant 0 : index
      %13 = vector.load %arg4[%c0_11, %c0_12] : memref<1x256xf32, #tpu.memory_space<vmem>>, vector<1x256xf32>
      %14 = vector.broadcast %13 : vector<1x256xf32> to vector<8x256xf32>
      %15 = arith.addf %12, %14 : vector<8x256xf32>
      %cst_13 = arith.constant 0.000000e+00 : f32
      %16 = vector.broadcast %cst_13 : f32 to vector<8x256xf32>
      %17 = arith.maximumf %15, %16 : vector<8x256xf32>
      %18 = arith.truncf %17 : vector<8x256xf32> to vector<8x256xbf16>
      %c0_14 = arith.constant 0 : index
      %c0_15 = arith.constant 0 : index
      %19 = vector.load %arg5[%c0_14, %c0_15] : memref<256x128xbf16, #tpu.memory_space<vmem>>, vector<256x128xbf16>
      %cst_16 = arith.constant dense<0.000000e+00> : vector<8x128xf32>
      %20 = tpu.matmul %18, %19, %cst_16 {dimension_numbers = #tpu.dot_dimension_numbers<[1], [0], [0], [1], [0, 0, 1, 1], [], []>} : vector<8x256xbf16>, vector<256x128xbf16>, vector<8x128xf32> -> vector<8x128xf32>
      %c0_17 = arith.constant 0 : index
      %c0_18 = arith.constant 0 : index
      %21 = vector.load %arg6[%c0_17, %c0_18] : memref<1x128xf32, #tpu.memory_space<vmem>>, vector<1x128xf32>
      %22 = vector.broadcast %21 : vector<1x128xf32> to vector<8x128xf32>
      %23 = arith.addf %20, %22 : vector<8x128xf32>
      %c0_19 = arith.constant 0 : index
      %c0_20 = arith.constant 0 : index
      %24 = vector.load %arg7[%c0_19, %c0_20] : memref<8x128xf32, #tpu.memory_space<vmem>>, vector<8x128xf32>
      tpu.vector_store %arg7[%c0_19, %c0_20], %23 {strides = array<i32>} : memref<8x128xf32, #tpu.memory_space<vmem>>, vector<8x128xf32>,
    } else {
    }
    return
  }
  func.func @transform_0(%arg0: i32, %arg1: i32) -> (i32, i32) {
    %c0_i32 = arith.constant 0 : i32
    return %arg0, %arg1 : i32, i32
  }
  func.func @transform_1(%arg0: i32, %arg1: i32) -> (i32, i32) {
    %c0_i32 = arith.constant 0 : i32
    %c0_i32_0 = arith.constant 0 : i32
    return %arg1, %c0_i32 : i32, i32
  }
  func.func @transform_2(%arg0: i32, %arg1: i32) -> (i32, i32) {
    %c0_i32 = arith.constant 0 : i32
    %c0_i32_0 = arith.constant 0 : i32
    %c0_i32_1 = arith.constant 0 : i32
    return %c0_i32, %c0_i32_0 : i32, i32
  }
  func.func @transform_3(%arg0: i32, %arg1: i32) -> (i32, i32) {
    %c0_i32 = arith.constant 0 : i32
    %c0_i32_0 = arith.constant 0 : i32
    %c0_i32_1 = arith.constant 0 : i32
    return %c0_i32, %c0_i32_0 : i32, i32
  }
  func.func @transform_4(%arg0: i32, %arg1: i32) -> (i32, i32) {
    %c0_i32 = arith.constant 0 : i32
    %c0_i32_0 = arith.constant 0 : i32
    %c0_i32_1 = arith.constant 0 : i32
    return %c0_i32, %c0_i32_0 : i32, i32
  }
  func.func @transform_5(%arg0: i32, %arg1: i32) -> (i32, i32) {
    %c0_i32 = arith.constant 0 : i32
    %c0_i32_0 = arith.constant 0 : i32
    return %arg0, %c0_i32 : i32, i32
  }
}

module attributes {stable_mosaic.version = 11 : i64} {
  func.func @_clip_head_kernel(%arg0: i32, %arg1: i32, %arg2: memref<1xf32, #tpu.memory_space<smem>>, %arg3: memref<8x128xf32, #tpu.memory_space<vmem>>, %arg4: memref<128x128xbf16, #tpu.memory_space<vmem>>, %arg5: memref<8x128xf32, #tpu.memory_space<vmem>>) attributes {dimension_semantics = [#tpu.dimension_semantics<parallel>, #tpu.dimension_semantics<parallel>], iteration_bounds = array<i64: 1, 1>, scalar_prefetch = 1 : i64, scratch_operands = 0 : i64, tpu.core_type = #tpu.core_type<tc>, window_params = [{transform_indices = @transform_0, window_bounds = array<i64: 8, 128>}, {transform_indices = @transform_1, window_bounds = array<i64: 128, 128>}, {transform_indices = @transform_2, window_bounds = array<i64: 8, 128>}]} {
    %c0 = arith.constant 0 : index
    %c0_0 = arith.constant 0 : index
    %0 = vector.load %arg3[%c0, %c0_0] : memref<8x128xf32, #tpu.memory_space<vmem>>, vector<8x128xf32>
    %1 = arith.mulf %0, %0 : vector<8x128xf32>
    %cst = arith.constant dense<0.000000e+00> : vector<8xf32>
    %2 = vector.multi_reduction <add>, %1, %cst [1] : vector<8x128xf32> to vector<8xf32>
    %3 = vector.shape_cast %2 : vector<8xf32> to vector<8x1xf32>
    %cst_1 = arith.constant 1.000000e-24 : f32
    %4 = vector.broadcast %cst_1 : f32 to vector<8x1xf32>
    %5 = arith.maximumf %3, %4 : vector<8x1xf32>
    %6 = math.rsqrt %5 : vector<8x1xf32>
    %c0_2 = arith.constant 0 : index
    %7 = memref.load %arg2[%c0_2] : memref<1xf32, #tpu.memory_space<smem>>
    %8 = vector.broadcast %7 : f32 to vector<8x1xf32>
    %9 = arith.mulf %6, %8 : vector<8x1xf32>
    %10 = vector.broadcast %9 : vector<8x1xf32> to vector<8x128xf32>
    %11 = arith.mulf %0, %10 : vector<8x128xf32>
    %12 = arith.truncf %11 : vector<8x128xf32> to vector<8x128xbf16>
    %c0_3 = arith.constant 0 : index
    %c0_4 = arith.constant 0 : index
    %13 = vector.load %arg4[%c0_3, %c0_4] : memref<128x128xbf16, #tpu.memory_space<vmem>>, vector<128x128xbf16>
    %cst_5 = arith.constant dense<0.000000e+00> : vector<8x128xf32>
    %14 = tpu.matmul %12, %13, %cst_5 {dimension_numbers = #tpu.dot_dimension_numbers<[1], [0], [0], [1], [0, 0, 1, 1], [], []>} : vector<8x128xbf16>, vector<128x128xbf16>, vector<8x128xf32> -> vector<8x128xf32>
    %c0_6 = arith.constant 0 : index
    %c0_7 = arith.constant 0 : index
    %15 = vector.load %arg5[%c0_6, %c0_7] : memref<8x128xf32, #tpu.memory_space<vmem>>, vector<8x128xf32>
    tpu.vector_store %arg5[%c0_6, %c0_7], %14 {strides = array<i32>} : memref<8x128xf32, #tpu.memory_space<vmem>>, vector<8x128xf32>,
    return
  }
  func.func @transform_0(%arg0: i32, %arg1: i32, %arg2: memref<1xf32, #tpu.memory_space<smem>>) -> (i32, i32) {
    %c0_i32 = arith.constant 0 : i32
    %c0_i32_0 = arith.constant 0 : i32
    return %arg0, %c0_i32 : i32, i32
  }
  func.func @transform_1(%arg0: i32, %arg1: i32, %arg2: memref<1xf32, #tpu.memory_space<smem>>) -> (i32, i32) {
    %c0_i32 = arith.constant 0 : i32
    %c0_i32_0 = arith.constant 0 : i32
    return %c0_i32, %arg1 : i32, i32
  }
  func.func @transform_2(%arg0: i32, %arg1: i32, %arg2: memref<1xf32, #tpu.memory_space<smem>>) -> (i32, i32) {
    %c0_i32 = arith.constant 0 : i32
    return %arg0, %arg1 : i32, i32
  }
}

</mosaic_0001>

<llo_original>
// kernel: geoclip_forward.5
$region0: #{geoclip_forward.5}
  #allocation0 [shape = 'u32[]', space=smem, size = 0x4, offset = 0x4, fixed_abs, tag = 'smem constant byte address 0x4 - core index']
  #allocation1 [shape = 'u32[144,128]{1,0:T(1,128)}', space=vmem, size = 0x12000, scoped, tag = 'internal scratch']
  #allocation2 [shape = 's32[1]{0}', space=sflag, size = 0x4, scoped, tag = 'scoped memory for geoclip_forward.5']
  #allocation3 [shape = 'f32[1]{0:T(128)S(6)}', space=smem, size = 0x200, scoped, tag = 'prefetched SMEM operand 0']
  %s0 = inlined_call_operand.<no memory space> [shape: f32[1], index: 0, kind: input, shape index: {}]
  %s1 = inlined_call_operand.vmem [shape: f32[8,128], index: 1, kind: input, shape index: {}]
  %s2 = inlined_call_operand.vmem [shape: bf16[128,128], index: 2, kind: input, shape index: {}]
  %s3 = inlined_call_operand.vmem [shape: f32[8,128], index: 3, kind: output, shape index: {}]
  %s4 = sld [smem:[#allocation0]]
  $region18: #{geoclip_forward.5} parent=0
    _
  %s6 = ssub.s32 1, %s4
  %s7 = scalar_select 0, %s6, %s4
  %8 = sst [smem:[#allocation3]] %s0
  // Predicated region
  $region2: #{geoclip_forward.5} parent=0 // pred_check
    _
  $region3: #{geoclip_forward.5} parent=0 // pred_check_branch
    %10 = sbr.rel (0) target = $region5
  $region4: #{geoclip_forward.5} parent=0 // pred_region
    _
  $region5: #{geoclip_forward.5} parent=0 // pred_fallthru
    _
  // Predicated region
  $region6: #{geoclip_forward.5} parent=0 // pred_check
    _
  $region7: #{geoclip_forward.5} parent=0 // pred_check_branch
    %12 = sbr.rel (0) target = $region9
  $region8: #{geoclip_forward.5} parent=0 // pred_region
    _
  $region9: #{geoclip_forward.5} parent=0 // pred_fallthru
    _
  %v14 = vld [vmem:[%s1] sm:$0xff]
  %v15 = vmul.f32 %v14, %v14
  %16 = vadd.xlane.f32.xlu0 %v15
  %v17 = vpop.xlane.xlu0 %16
  %v18 = vmax.f32 %v17, 1e-24
  %v19 = vrsqrt.pop %v18
  %s20 = sld [smem:[#allocation3]]
  %v21 = vstv %s20
  %v22 = vmul.f32 %v19, %v21
  %v23 = vmul.f32 %v14, %v22
  %v24 = vpack.c.bf16 %v23, %v23
  %v25 = vld [vmem:[%s2] sm:$0xf]
  %v26 = vld [vmem:[%s2 + $0x4] sm:$0xf]
  %v27 = vld [vmem:[%s2 + $0x8] sm:$0xf]
  %v28 = vld [vmem:[%s2 + $0xc] sm:$0xf]
  %v29 = vld [vmem:[%s2 + $0x10] sm:$0xf]
  %v30 = vld [vmem:[%s2 + $0x14] sm:$0xf]
  %v31 = vld [vmem:[%s2 + $0x18] sm:$0xf]
  %v32 = vld [vmem:[%s2 + $0x1c] sm:$0xf]
  %v33 = vld [vmem:[%s2 + $0x20] sm:$0xf]
  %v34 = vld [vmem:[%s2 + $0x24] sm:$0xf]
  %v35 = vld [vmem:[%s2 + $0x28] sm:$0xf]
  %v36 = vld [vmem:[%s2 + $0x2c] sm:$0xf]
  %v37 = vld [vmem:[%s2 + $0x30] sm:$0xf]
  %v38 = vld [vmem:[%s2 + $0x34] sm:$0xf]
  %v39 = vld [vmem:[%s2 + $0x38] sm:$0xf]
  %v40 = vld [vmem:[%s2 + $0x3c] sm:$0xf]
  %v57 = vunpack.c.l.b16 %v25
  %v58 = vunpack.c.l.b16 %v26
  %v59 = vunpack.c.l.b16 %v27
  %v60 = vunpack.c.l.b16 %v28
  %v61 = vunpack.c.l.b16 %v29
  %v62 = vunpack.c.l.b16 %v30
  %v63 = vunpack.c.l.b16 %v31
  %v64 = vunpack.c.l.b16 %v32
  %v65 = vunpack.c.l.b16 %v33
  %v66 = vunpack.c.l.b16 %v34
  %v67 = vunpack.c.l.b16 %v35
  %v68 = vunpack.c.l.b16 %v36
  %v69 = vunpack.c.l.b16 %v37
  %v70 = vunpack.c.l.b16 %v38
  %v71 = vunpack.c.l.b16 %v39
  %v72 = vunpack.c.l.b16 %v40
  %v73 = vpack.c.b16 %v58, %v57
  %v74 = vpack.c.b16 %v60, %v59
  %v75 = vpack.c.b16 %v62, %v61
  %v76 = vpack.c.b16 %v64, %v63
  %v77 = vpack.c.b16 %v66, %v65
  %v78 = vpack.c.b16 %v68, %v67
  %v79 = vpack.c.b16 %v70, %v69
  %v80 = vpack.c.b16 %v72, %v71
  %89 = vmatprep.subr.bf16.mxu0 0
  %90 = vmatpush1.bf16.msra.mxu0 %v73
  %91 = vmatprep.subr.bf16.mxu0 0
  %92 = vmatpush1.bf16.msra.mxu0 %v74
  %93 = vmatprep.subr.bf16.mxu0 0
  %94 = vmatpush1.bf16.msra.mxu0 %v75
  %95 = vmatprep.subr.bf16.mxu0 0
  %96 = vmatpush1.bf16.msra.mxu0 %v76
  %97 = vmatprep.subr.bf16.mxu0 0
  %98 = vmatpush1.bf16.msra.mxu0 %v77
  %99 = vmatprep.subr.bf16.mxu0 0
  %100 = vmatpush1.bf16.msra.mxu0 %v78
  %101 = vmatprep.subr.bf16.mxu0 0
  %102 = vmatpush1.bf16.msra.mxu0 %v79
  %103 = vmatprep.subr.bf16.mxu0 0
  %104 = vmatpush1.bf16.msra.mxu0 %v80
  %105 = vmatprep.subr.bf16.mxu0 0
  %106 = vmatpush1.bf16.msra.mxu0 0
  %107 = vmatprep.subr.bf16.mxu0 0
  %108 = vmatpush1.bf16.msra.mxu0 0
  %109 = vmatprep.subr.bf16.mxu0 0
  %110 = vmatpush1.bf16.msra.mxu0 0
  %111 = vmatprep.subr.bf16.mxu0 0
  %112 = vmatpush1.bf16.msra.mxu0 0
  %113 = vmatprep.subr.bf16.mxu0 0
  %114 = vmatpush1.bf16.msra.mxu0 0
  %115 = vmatprep.subr.bf16.mxu0 0
  %116 = vmatpush1.bf16.msra.mxu0 0
  %117 = vmatprep.subr.bf16.mxu0 0
  %118 = vmatpush1.bf16.msra.mxu0 0
  %119 = vmatprep.subr.bf16.mxu0 0
  %120 = vmatpush1.bf16.msra.mxu0 0
  %121 = vmatprep.mubr.bf16.mxu0 0
  %122 = vmatmul.mubr.bf16.gmra.mrb[0].mxu0 %v24
  %v123 = vpop.f32.mrb[0].mxu0
  %v124 = vadd.f32 0.0, %v123
  %v125 = vpop.f32.mrb[0].mxu0
  %v126 = vpop.f32.mrb[0].mxu0
  %v127 = vpop.f32.mrb[0].mxu0
  %128 = vdwg.mxu0
  %129 = vst [vmem:[%s3] sm:$0xff] %v124
  // Predicated region
  $region10: #{geoclip_forward.5} parent=0 // pred_check
    _
  $region11: #{geoclip_forward.5} parent=0 // pred_check_branch
    %131 = sbr.rel (0) target = $region13
  $region12: #{geoclip_forward.5} parent=0 // pred_region
    _
  $region13: #{geoclip_forward.5} parent=0 // pred_fallthru
    _
  // Predicated region
  $region14: #{geoclip_forward.5} parent=0 // pred_check
    _
  $region15: #{geoclip_forward.5} parent=0 // pred_check_branch
    %133 = sbr.rel (0) target = $region17
  $region16: #{geoclip_forward.5} parent=0 // pred_region
    _
  $region17: #{geoclip_forward.5} parent=0 // pred_fallthru
    _

// kernel: geoclip_forward.4
$region0: #{geoclip_forward.4}
  #allocation0 [shape = 'u32[]', space=smem, size = 0x4, offset = 0x4, fixed_abs, tag = 'smem constant byte address 0x4 - core index']
  #allocation1 [shape = 'u32[144,128]{1,0:T(1,128)}', space=vmem, size = 0x12000, scoped, tag = 'internal scratch']
  #allocation2 [shape = 'f32[8,128]{1,0:T(8,128)}', space=vmem, size = 0x1000, scoped, tag = 'scratch operand']
  %s0 = inlined_call_operand.vmem [shape: f32[8,2], index: 0, kind: input, shape index: {}]
  %s1 = inlined_call_operand.vmem [shape: f32[3,2,128], index: 1, kind: input, shape index: {}]
  %s2 = inlined_call_operand.hbm [shape: bf16[3,256,256], index: 2, kind: input, shape index: {}]
  %s3 = inlined_call_operand.vmem [shape: f32[3,1,256], index: 3, kind: input, shape index: {}]
  %s4 = inlined_call_operand.hbm [shape: bf16[3,256,128], index: 4, kind: input, shape index: {}]
  %s5 = inlined_call_operand.vmem [shape: f32[3,1,128], index: 5, kind: input, shape index: {}]
  %s6 = inlined_call_operand.vmem [shape: f32[8,128], index: 6, kind: output, shape index: {}]
  %s7 = sld [smem:[#allocation0]]
  $region73: #{geoclip_forward.4} parent=0
    _
  %s9 = ssub.s32 1, %s7
  %s10 = scalar_select 0, %s9, %s7
  $region1: #{geoclip_forward.4} parent=0
    #allocation3 [shape = 'u8[262144]{0}', space=vmem, size = 0x40000, scoped, tag = 'input window, operand 2']
    #allocation4 [shape = 's32[2]{0}', space=sflag, size = 0x8, scoped, tag = 'scoped memory for geoclip_forward.4']
    #allocation5 [shape = 'u8[131072]{0}', space=vmem, size = 0x20000, scoped, tag = 'input window, operand 4']
    #allocation6 [shape = 's32[2]{0}', space=sflag, size = 0x8, scoped, tag = 'scoped memory for geoclip_forward.4']
    %11 = vsyncpa [#allocation4], 0
    %s12 = scalar_lea.sflag [#allocation4], 1
    %13 = vsyncpa %s12, 0
    %14 = vsyncpa [#allocation6], 0
    %s15 = scalar_lea.sflag [#allocation6], 1
    %16 = vsyncpa %s15, 0
    loop: start=0, step=1, limit=5
    $region2: #{geoclip_forward.4} parent=1 // loop_pre_header
      _
    $region3: #{geoclip_forward.4} parent=1 // loop_header
      %s18 = sphi 0, %s22
      %p19 = scmp.ge.s32.totalorder %s18, 5
      %s25 = sphi 0, %s37
      %s26 = sphi 0, %s33
      %s27 = sphi 0, %s25
      %s28 = sphi 0, %s26
      %s29 = sphi 0, %s27
      %s30 = sphi 0, %s28
      %s40 = sphi 0, %s42
      %s43 = sphi 0, %s40
      %s44 = sphi 0, %s43
      %s60 = sphi 0, %s44
      %s66 = sphi 0, %s68
      %s69 = sphi 0, %s66
      %s70 = sphi 0, %s69
      %s86 = sphi 0, %s70
      %s92 = sphi 0, %s94
      %s95 = sphi 0, %s92
      %s96 = sphi 0, %s95
      %s112 = sphi 0, %s96
      %s118 = sphi 0, %s120
      %s121 = sphi 0, %s118
      %s122 = sphi 0, %s121
      %s138 = sphi 0, %s122
      %s144 = sphi 0, %s146
      %s147 = sphi 0, %s144
      %s148 = sphi 0, %s147
      %s164 = sphi 0, %s148
      %s170 = sphi 0, %s172
      %s173 = sphi 0, %s170
      %s174 = sphi 0, %s173
      %s190 = sphi 0, %s174
      %s196 = sphi 0, %s198
      %s199 = sphi 0, %s196
      %s200 = sphi 0, %s199
      %s216 = sphi 0, %s200
    $region4: #{geoclip_forward.4} parent=1 // loop_header_branch
      %21 = sbr.rel (%p19) target = $region8
    $region5: #{geoclip_forward.4} parent=1 // loop_body
      %s23 = ssub.s32 %s18, 1
      %s24 = ssub.s32 %s18, 2
      %s31 = sadd.s32 1, %s26
      %p32 = scmp.ge.s32.totalorder %s31, 3
      %s33 = scalar_select %p32, 0, %s31
      %s34 = sadd.s32 1, %s25
      %s35 = scalar_select %p32, %s34, %s25
      %p36 = scmp.ge.s32.totalorder %s35, 1
      %s37 = scalar_select %p36, 0, %s35
      %s38 = ssub.s32 %s25, %s37
      %p39 = scmp.eq.s32.totalorder %s38, 0
      %s41 = sadd.s32 %s40, 1
      %s42 = scalar_select %p39, %s40, %s41
      %p45 = pneg %p39
      %p46 = scmp.eq.s32.totalorder %s18, 2
      %p47 = por %p45, %p46
      %p48 = scmp.ne.s32.totalorder %s40, %s43
      %p49 = scmp.eq.s32.totalorder %s18, 0
      %p50 = por %p48, %p49
      %p51 = scmp.ne.s32.totalorder %s40, %s43
      %p52 = scmp.eq.s32.totalorder %s23, 2
      %p53 = por %p51, %p52
      %p54 = scmp.ne.s32.totalorder %s43, %s44
      %p55 = scmp.eq.s32.totalorder %s23, 0
      %p56 = por %p54, %p55
      %p57 = scmp.ne.s32.totalorder %s43, %s44
      %p58 = scmp.eq.s32.totalorder %s24, 2
      %p59 = por %p57, %p58
      %p61 = scmp.ne.s32.totalorder %s44, %s60
      %p62 = scmp.eq.s32.totalorder %s24, 0
      %p63 = por %p61, %p62
      %s64 = ssub.s32 %s26, %s33
      %p65 = scmp.eq.s32.totalorder %s64, 0
      %s67 = sadd.s32 %s66, 1
      %s68 = scalar_select %p65, %s66, %s67
      %p71 = pneg %p65
      %p72 = scmp.eq.s32.totalorder %s18, 2
      %p73 = por %p71, %p72
      %p74 = scmp.ne.s32.totalorder %s66, %s69
      %p75 = scmp.eq.s32.totalorder %s18, 0
      %p76 = por %p74, %p75
      %p77 = scmp.ne.s32.totalorder %s66, %s69
      %p78 = scmp.eq.s32.totalorder %s23, 2
      %p79 = por %p77, %p78
      %p80 = scmp.ne.s32.totalorder %s69, %s70
      %p81 = scmp.eq.s32.totalorder %s23, 0
      %p82 = por %p80, %p81
      %p83 = scmp.ne.s32.totalorder %s69, %s70
      %p84 = scmp.eq.s32.totalorder %s24, 2
      %p85 = por %p83, %p84
      %p87 = scmp.ne.s32.totalorder %s70, %s86
      %p88 = scmp.eq.s32.totalorder %s24, 0
      %p89 = por %p87, %p88
      %s90 = ssub.s32 %s26, %s33
      %p91 = scmp.eq.s32.totalorder %s90, 0
      %s93 = sadd.s32 %s92, 1
      %s94 = scalar_select %p91, %s92, %s93
      %p97 = pneg %p91
      %p98 = scmp.eq.s32.totalorder %s18, 2
      %p99 = por %p97, %p98
      %p100 = scmp.ne.s32.totalorder %s92, %s95
      %p101 = scmp.eq.s32.totalorder %s18, 0
      %p102 = por %p100, %p101
      %p103 = scmp.ne.s32.totalorder %s92, %s95
      %p104 = scmp.eq.s32.totalorder %s23, 2
      %p105 = por %p103, %p104
      %p106 = scmp.ne.s32.totalorder %s95, %s96
      %p107 = scmp.eq.s32.totalorder %s23, 0
      %p108 = por %p106, %p107
      %p109 = scmp.ne.s32.totalorder %s95, %s96
      %p110 = scmp.eq.s32.totalorder %s24, 2
      %p111 = por %p109, %p110
      %p113 = scmp.ne.s32.totalorder %s96, %s112
      %p114 = scmp.eq.s32.totalorder %s24, 0
      %p115 = por %p113, %p114
      %s116 = ssub.s32 %s26, %s33
      %p117 = scmp.eq.s32.totalorder %s116, 0
      %s119 = sadd.s32 %s118, 1
      %s120 = scalar_select %p117, %s118, %s119
      %p123 = pneg %p117
      %p124 = scmp.eq.s32.totalorder %s18, 2
      %p125 = por %p123, %p124
      %p126 = scmp.ne.s32.totalorder %s118, %s121
      %p127 = scmp.eq.s32.totalorder %s18, 0
      %p128 = por %p126, %p127
      %p129 = scmp.ne.s32.totalorder %s118, %s121
      %p130 = scmp.eq.s32.totalorder %s23, 2
      %p131 = por %p129, %p130
      %p132 = scmp.ne.s32.totalorder %s121, %s122
      %p133 = scmp.eq.s32.totalorder %s23, 0
      %p134 = por %p132, %p133
      %p135 = scmp.ne.s32.totalorder %s121, %s122
      %p136 = scmp.eq.s32.totalorder %s24, 2
      %p137 = por %p135, %p136
      %p139 = scmp.ne.s32.totalorder %s122, %s138
      %p140 = scmp.eq.s32.totalorder %s24, 0
      %p141 = por %p139, %p140
      %s142 = ssub.s32 %s26, %s33
      %p143 = scmp.eq.s32.totalorder %s142, 0
      %s145 = sadd.s32 %s144, 1
      %s146 = scalar_select %p143, %s144, %s145
      %p149 = pneg %p143
      %p150 = scmp.eq.s32.totalorder %s18, 2
      %p151 = por %p149, %p150
      %p152 = scmp.ne.s32.totalorder %s144, %s147
      %p153 = scmp.eq.s32.totalorder %s18, 0
      %p154 = por %p152, %p153
      %p155 = scmp.ne.s32.totalorder %s144, %s147
      %p156 = scmp.eq.s32.totalorder %s23, 2
      %p157 = por %p155, %p156
      %p158 = scmp.ne.s32.totalorder %s147, %s148
      %p159 = scmp.eq.s32.totalorder %s23, 0
      %p160 = por %p158, %p159
      %p161 = scmp.ne.s32.totalorder %s147, %s148
      %p162 = scmp.eq.s32.totalorder %s24, 2
      %p163 = por %p161, %p162
      %p165 = scmp.ne.s32.totalorder %s148, %s164
      %p166 = scmp.eq.s32.totalorder %s24, 0
      %p167 = por %p165, %p166
      %s168 = ssub.s32 %s26, %s33
      %p169 = scmp.eq.s32.totalorder %s168, 0
      %s171 = sadd.s32 %s170, 1
      %s172 = scalar_select %p169, %s170, %s171
      %p175 = pneg %p169
      %p176 = scmp.eq.s32.totalorder %s18, 2
      %p177 = por %p175, %p176
      %p178 = scmp.ne.s32.totalorder %s170, %s173
      %p179 = scmp.eq.s32.totalorder %s18, 0
      %p180 = por %p178, %p179
      %p181 = scmp.ne.s32.totalorder %s170, %s173
      %p182 = scmp.eq.s32.totalorder %s23, 2
      %p183 = por %p181, %p182
      %p184 = scmp.ne.s32.totalorder %s173, %s174
      %p185 = scmp.eq.s32.totalorder %s23, 0
      %p186 = por %p184, %p185
      %p187 = scmp.ne.s32.totalorder %s173, %s174
      %p188 = scmp.eq.s32.totalorder %s24, 2
      %p189 = por %p187, %p188
      %p191 = scmp.ne.s32.totalorder %s174, %s190
      %p192 = scmp.eq.s32.totalorder %s24, 0
      %p193 = por %p191, %p192
      %s194 = ssub.s32 %s25, %s37
      %p195 = scmp.eq.s32.totalorder %s194, 0
      %s197 = sadd.s32 %s196, 1
      %s198 = scalar_select %p195, %s196, %s197
      %p201 = pneg %p195
      %p202 = scmp.eq.s32.totalorder %s18, 2
      %p203 = por %p201, %p202
      %p204 = scmp.ne.s32.totalorder %s196, %s199
      %p205 = scmp.eq.s32.totalorder %s18, 0
      %p206 = por %p204, %p205
      %p207 = scmp.ne.s32.totalorder %s196, %s199
      %p208 = scmp.eq.s32.totalorder %s23, 2
      %p209 = por %p207, %p208
      %p210 = scmp.ne.s32.totalorder %s199, %s200
      %p211 = scmp.eq.s32.totalorder %s23, 0
      %p212 = por %p210, %p211
      %p213 = scmp.ne.s32.totalorder %s199, %s200
      %p214 = scmp.eq.s32.totalorder %s24, 2
      %p215 = por %p213, %p214
      %p217 = scmp.ne.s32.totalorder %s200, %s216
      %p218 = scmp.eq.s32.totalorder %s24, 0
      %p219 = por %p217, %p218
      %p220 = scmp.le.s32.totalorder 1, %s18
      %p221 = scmp.lt.s32.totalorder %s18, 4
      %p222 = pnand %p220, %p221
      %p223 = pneg %p222
      // Predicated region
      $region9: #{geoclip_forward.4} parent=5 // pred_check
        _
      $region10: #{geoclip_forward.4} parent=5 // pred_check_branch
        %225 = sbr.rel (%p222) target = $region12
      $region11: #{geoclip_forward.4} parent=5 // pred_region
        %s226 = ssub.s32 %s18, 1
        // Predicated region
        $region13: #{geoclip_forward.4} parent=11 // pred_check
          %p227 = pneg %p56
        $region14: #{geoclip_forward.4} parent=11 // pred_check_branch
          %229 = sbr.rel (%p227) target = $region16
        $region15: #{geoclip_forward.4} parent=11 // pred_region
          %p230 = scmp.lt.s32.totalorder %s27, 0
          %s231 = scalar_select %p230, %s27, 0
          %s232 = smul.addr %s231, 8
          %s233 = scalar_lea.vmem %s0, %s232
        $region16: #{geoclip_forward.4} parent=11 // pred_fallthru
          _
      $region12: #{geoclip_forward.4} parent=5 // pred_fallthru
        _
      %p234 = scmp.lt.s32.totalorder %s18, 3
      // Predicated region
      $region17: #{geoclip_forward.4} parent=5 // pred_check
        %p235 = pneg %p234
      $region18: #{geoclip_forward.4} parent=5 // pred_check_branch
        %237 = sbr.rel (%p235) target = $region20
      $region19: #{geoclip_forward.4} parent=5 // pred_region
        // Predicated region
        $region21: #{geoclip_forward.4} parent=19 // pred_check
          %p238 = pneg %p76
        $region22: #{geoclip_forward.4} parent=19 // pred_check_branch
          %240 = sbr.rel (%p238) target = $region24
        $region23: #{geoclip_forward.4} parent=19 // pred_region
          %p241 = scmp.lt.s32.totalorder %s26, 2
          %s242 = scalar_select %p241, %s26, 2
          %s243 = smul.addr %s242, 2
          %s244 = scalar_lea.vmem %s1, %s243
        $region24: #{geoclip_forward.4} parent=19 // pred_fallthru
          _
        // Predicated region
        $region25: #{geoclip_forward.4} parent=19 // pred_check
          %p245 = pneg %p102
        $region26: #{geoclip_forward.4} parent=19 // pred_check_branch
          %247 = sbr.rel (%p245) target = $region28
        $region27: #{geoclip_forward.4} parent=19 // pred_region
          %s248 = sand.u32 %s92, 1
          %s249 = scalar_lea.sflag [#allocation4], %s248
          %s250 = sand.u32 %s92, 1
          %s251 = smul.addr %s250, 256
          %s252 = scalar_lea.vmem [#allocation3], %s251
          %s254 = ssub.s32 4096, 4096
          %255 = vsyncadd %s249, %s254
          %s256 = smul.addr %s26, 64
          %s257 = smul.addr %s256, 64
          %s258 = scalar_lea.hbm %s2, %s257
          %s259 = sshll.u32 %s252, 4
          %s260 = int_to_ptr.vmem [resolvable:$true] %s259
          %265 = dma.hbm_to_vmem [thread:$0]  %s258, 4096, %s260, %s249, 128, 128, 8
        $region28: #{geoclip_forward.4} parent=19 // pred_fallthru
          _
        // Predicated region
        $region29: #{geoclip_forward.4} parent=19 // pred_check
          %p266 = pneg %p128
        $region30: #{geoclip_forward.4} parent=19 // pred_check_branch
          %268 = sbr.rel (%p266) target = $region32
        $region31: #{geoclip_forward.4} parent=19 // pred_region
          %p269 = scmp.lt.s32.totalorder %s26, 2
          %s270 = scalar_select %p269, %s26, 2
          %s271 = smul.addr %s270, 2
          %s272 = scalar_lea.vmem %s3, %s271
        $region32: #{geoclip_forward.4} parent=19 // pred_fallthru
          _
        // Predicated region
        $region33: #{geoclip_forward.4} parent=19 // pred_check
          %p273 = pneg %p154
        $region34: #{geoclip_forward.4} parent=19 // pred_check_branch
          %275 = sbr.rel (%p273) target = $region36
        $region35: #{geoclip_forward.4} parent=19 // pred_region
          %s276 = sand.u32 %s144, 1
          %s277 = scalar_lea.sflag [#allocation6], %s276
          %s278 = sand.u32 %s144, 1
          %s279 = smul.addr %s278, 128
          %s280 = scalar_lea.vmem [#allocation5], %s279
          %s282 = ssub.s32 2048, 2048
          %283 = vsyncadd %s277, %s282
          %s284 = smul.addr %s26, 32
          %s285 = smul.addr %s284, 64
          %s286 = scalar_lea.hbm %s4, %s285
          %s287 = sshll.u32 %s280, 4
          %s288 = int_to_ptr.vmem [resolvable:$true] %s287
          %293 = dma.hbm_to_vmem [thread:$0]  %s286, 2048, %s288, %s277, 64, 64, 4
        $region36: #{geoclip_forward.4} parent=19 // pred_fallthru
          _
        // Predicated region
        $region37: #{geoclip_forward.4} parent=19 // pred_check
          %p294 = pneg %p180
        $region38: #{geoclip_forward.4} parent=19 // pred_check_branch
          %296 = sbr.rel (%p294) target = $region40
        $region39: #{geoclip_forward.4} parent=19 // pred_region
          %p297 = scmp.lt.s32.totalorder %s26, 2
          %s298 = scalar_select %p297, %s26, 2
          %s299 = scalar_lea.vmem %s5, %s298
        $region40: #{geoclip_forward.4} parent=19 // pred_fallthru
          _
      $region20: #{geoclip_forward.4} parent=5 // pred_fallthru
        _
      %p300 = scmp.le.s32.totalorder 1, %s18
      %p301 = scmp.lt.s32.totalorder %s18, 4
      %p302 = pnand %p300, %p301
      %p303 = pneg %p302
      // Predicated region
      $region41: #{geoclip_forward.4} parent=5 // pred_check
        _
      $region42: #{geoclip_forward.4} parent=5 // pred_check_branch
        %305 = sbr.rel (%p302) target = $region44
      $region43: #{geoclip_forward.4} parent=5 // pred_region
        %s306 = ssub.s32 %s18, 1
        %s307 = sand.u32 %s95, 1
        %s308 = scalar_lea.sflag [#allocation4], %s307
        %s309 = sand.u32 %s95, 1
        %s310 = smul.addr %s309, 256
        %s311 = scalar_lea.vmem [#allocation3], %s310
        // Predicated region
        $region45: #{geoclip_forward.4} parent=43 // pred_check
          %p312 = pneg %p108
        $region46: #{geoclip_forward.4} parent=43 // pred_check_branch
          %314 = sbr.rel (%p312) target = $region48
        $region47: #{geoclip_forward.4} parent=43 // pred_region
          %315 = dma.done %s308, 4096
        $region48: #{geoclip_forward.4} parent=43 // pred_fallthru
          _
        %s316 = sand.u32 %s147, 1
        %s317 = scalar_lea.sflag [#allocation6], %s316
        %s318 = sand.u32 %s147, 1
        %s319 = smul.addr %s318, 128
        %s320 = scalar_lea.vmem [#allocation5], %s319
        // Predicated region
        $region49: #{geoclip_forward.4} parent=43 // pred_check
          %p321 = pneg %p160
        $region50: #{geoclip_forward.4} parent=43 // pred_check_branch
          %323 = sbr.rel (%p321) target = $region52
        $region51: #{geoclip_forward.4} parent=43 // pred_region
          %324 = dma.done %s317, 2048
        $region52: #{geoclip_forward.4} parent=43 // pred_fallthru
          _
        %p325 = scmp.lt.s32.totalorder %s27, 0
        %s326 = scalar_select %p325, %s27, 0
        %s327 = smul.addr %s326, 8
        %s328 = scalar_lea.vmem %s0, %s327
        %p329 = pneg %p56
        %p330 = pneg %p53
        %p331 = scmp.lt.s32.totalorder %s28, 2
        %s332 = scalar_select %p331, %s28, 2
        %s333 = smul.addr %s332, 2
        %s334 = scalar_lea.vmem %s1, %s333
        %p335 = pneg %p82
        %p336 = pneg %p79
        %s337 = sand.u32 %s95, 1
        %s338 = scalar_lea.sflag [#allocation4], %s337
        %s339 = sand.u32 %s95, 1
        %s340 = smul.addr %s339, 256
        %s341 = scalar_lea.vmem [#allocation3], %s340
        %p342 = pneg %p108
        %p343 = pneg %p105
        %p344 = scmp.lt.s32.totalorder %s28, 2
        %s345 = scalar_select %p344, %s28, 2
        %s346 = smul.addr %s345, 2
        %s347 = scalar_lea.vmem %s3, %s346
        %p348 = pneg %p134
        %p349 = pneg %p131
        %s350 = sand.u32 %s147, 1
        %s351 = scalar_lea.sflag [#allocation6], %s350
        %s352 = sand.u32 %s147, 1
        %s353 = smul.addr %s352, 128
        %s354 = scalar_lea.vmem [#allocation5], %s353
        %p355 = pneg %p160
        %p356 = pneg %p157
        %p357 = scmp.lt.s32.totalorder %s28, 2
        %s358 = scalar_select %p357, %s28, 2
        %s359 = scalar_lea.vmem %s5, %s358
        %p360 = pneg %p186
        %p361 = pneg %p183
        %p362 = pneg %p212
        %p363 = pneg %p209
        %p364 = scmp.lt.s32.totalorder %s27, 0
        %s365 = scalar_select %p364, %s27, 0
        %s366 = smul.addr %s365, 8
        %s367 = scalar_lea.vmem %s6, %s366
        %p368 = scmp.lt.s32.totalorder %s27, 0
        %s369 = scalar_select %p368, %s27, 0
        %s370 = smul.addr %s369, 8
        %s371 = scalar_lea.vmem %s0, %s370
        %p372 = scmp.lt.s32.totalorder %s28, 2
        %s373 = scalar_select %p372, %s28, 2
        %s374 = smul.addr %s373, 2
        %s375 = scalar_lea.vmem %s1, %s374
        %p376 = scmp.lt.s32.totalorder %s28, 2
        %s377 = scalar_select %p376, %s28, 2
        %s378 = smul.addr %s377, 2
        %s379 = scalar_lea.vmem %s3, %s378
        %p380 = scmp.lt.s32.totalorder %s28, 2
        %s381 = scalar_select %p380, %s28, 2
        %s382 = scalar_lea.vmem %s5, %s381
        %p383 = scmp.lt.s32.totalorder %s27, 0
        %s384 = scalar_select %p383, %s27, 0
        %s385 = smul.addr %s384, 8
        %s386 = scalar_lea.vmem %s6, %s385
        %p388 = scmp.eq.s32.totalorder %s28, 0
        // Predicated region
        $region53: #{geoclip_forward.4} parent=43 // pred_check
          %p389 = pneg %p388
        $region54: #{geoclip_forward.4} parent=43 // pred_check_branch
          %391 = sbr.rel (%p389) target = $region56
        $region55: #{geoclip_forward.4} parent=43 // pred_region
          %392 = vst [vmem:[#allocation2] sm:$0xff] 0.0
        $region56: #{geoclip_forward.4} parent=43 // pred_fallthru
          _
        %v393 = vld [vmem:[%s371] sm:$0xff]
        %v394 = vld [vmem:[%s375] sm:$0x3]
        %396 = vset.pattern.permute.xlu0 0
        %397 = vperm.xlu0 %396, %v393
        %v398 = vpop.permute.xlu0 %397
        %v400 = vlaneseq
        %v401 = vshrl.u32 %v400, 7
        %v402 = vsub.s32 0, %v401
        %v403 = vrot.slane %v394, %v402
        %v404 = vmul.f32 %v398, %v403
        %405 = vset.pattern.permute.xlu0 1
        %406 = vperm.xlu0 %405, %v393
        %v407 = vpop.permute.xlu0 %406
        %v409 = vlaneseq
        %v410 = vshrl.u32 %v409, 7
        %v411 = vsub.s32 1, %v410
        %v412 = vrot.slane %v394, %v411
        %v413 = vmul.f32 %v407, %v412
        %v414 = vadd.f32 %v404, %v413
        %v415 = vmul.f32 %v414, 6.2831855
        %v416 = vand.u32 2147483647, %v415
        %vm417 = vcmp.le.f32.partialorder %v416, 0.7853982
        %vm418 = vcmp.lt.s32.totalorder %v415, 0
        %v419 = vand.u32 %v415, 2139095040
        %v420 = vshrl.u32 %v419, 23
        %v421 = vsub.s32 %v420, 127
        %v422 = vand.u32 2147483647, %v415
        %v423 = vand.u32 %v422, 8388607
        %v424 = vor.u32 %v423, 8388608
        %v425 = vsub.s32 0, %v424
        %v426 = vadd.s32 %v421, 1
        %vm427 = vcmp.gt.s32.totalorder %v426, 0
        %v428 = vsel %vm427, %v426, 0
        %v429 = vshrl.u32 %v428, 5
        %v430 = vand.u32 %v428, 31
        %v431 = vsub.s32 32, %v430
        %v432 = vshrl.u32 683565275, %v431
        %v433 = vshll.u32 683565275, %v430
        %v434 = vshrl.u32 2475754826, %v431
        %v435 = vor.u32 %v433, %v434
        %v436 = vshll.u32 2475754826, %v430
        %v437 = vshrl.u32 2131351028, %v431
        %v438 = vor.u32 %v436, %v437
        %v439 = vshll.u32 2131351028, %v430
        %v440 = vshrl.u32 2102212464, %v431
        %v441 = vor.u32 %v439, %v440
        %v442 = vshll.u32 2102212464, %v430
        %v443 = vshrl.u32 920167782, %v431
        %v444 = vor.u32 %v442, %v443
        %v445 = vshll.u32 920167782, %v430
        %v446 = vshrl.u32 1326507024, %v431
        %v447 = vor.u32 %v445, %v446
        %vm448 = vcmp.lt.s32.totalorder %v429, 1
        %vm449 = vcmp.lt.s32.totalorder %v429, 2
        %vm450 = vcmp.lt.s32.totalorder %v429, 3
        %vm451 = vcmp.lt.s32.totalorder %v429, 4
        %v452 = vsel %vm448, %v432, %v435
        %v453 = vsel %vm451, %v441, 2102212464
        %v454 = vsel %vm450, %v438, %v453
        %v455 = vsel %vm449, %v452, %v454
        %v456 = vsel %vm448, %v435, %v438
        %v457 = vsel %vm451, %v444, 920167782
        %v458 = vsel %vm450, %v441, %v457
        %v459 = vsel %vm449, %v456, %v458
        %v460 = vsel %vm448, %v438, %v441
        %v461 = vsel %vm451, %v447, 1326507024
        %v462 = vsel %vm450, %v444, %v461
        %v463 = vsel %vm449, %v460, %v462
        %v464 = vshll.u32 %v424, 8
        %v465 = vmul.u32.u64.compose %v464, %v463
        %v466 = vextract.low.u32 %v465
        %v467 = vextract.high.u32 %v465
        %v468 = vmul.u32.u64.compose %v464, %v459
        %v469 = vextract.low.u32 %v468
        %v470 = vextract.high.u32 %v468
        %v471 = vmul.u32 %v464, %v455
        %v472 = vadd.s32 %v467, %v469
        %vm473 = vc.u32 %v467, %v469
        %v474 = vadd.s32 %v470, 1
        %v475 = vsel %vm473, %v474, %v470
        %v476 = vadd.s32 %v471, %v475
        %v477 = vadd.s32 %v476, 536870912
        %v478 = vshrl.u32 %v477, 30
        %v479 = vshll.u32 %v478, 30
        %v480 = vsub.s32 %v476, %v479
        %vm481 = vcmp.lt.s32.totalorder %v480, 0
        %v482 = vsub.s32 0, %v480
        %v483 = vsel %vm481, %v482, %v480
        %v484 = vclz %v483
        %v485 = vsub.s32 %v484, 2
        %vm486 = vcmp.gt.s32.totalorder 0, %v485
        %v487 = vsel %vm486, 0, %v485
        %v488 = vsub.s32 32, %v487
        %v489 = vshll.u32 %v480, %v487
        %v490 = vshrl.u32 %v472, %v488
        %v491 = vor.u32 %v489, %v490
        %v492 = vsub.s32 4294967266, %v487
        %v493 = vadd.s32 %v492, 127
        %v494 = vshll.u32 %v493, 23
        %v495 = vor.u32 4788187, %v494
        %v496 = vand.u32 2147483647, %v495
        %v498 = vcvt.s32.f32 %v491
        %v499 = vmul.f32 %v498, %v496
        %v500 = vxor.u32 %v499, 2147483648
        %v501 = vsel %vm418, %v500, %v499
        %v502 = vsub.s32 4, %v478
        %v503 = vsel %vm418, %v502, %v478
        %v504 = vsel %vm417, %v415, %v501
        %v505 = vsel %vm417, 0, %v503
        %v506 = vcosq.f32.pop %v504
        %v507 = vsinq.f32.pop %v504
        %vm508 = vweird.f32 %v415
        %v509 = vand.u32 %v505, 3
        %vm510 = vcmp.lt.s32.totalorder %v509, 2
        %vm511 = vcmp.eq.s32.totalorder %v509, 0
        %v512 = vxor.u32 %v507, 2147483648
        %v513 = vsel %vm511, %v506, %v512
        %vm514 = vcmp.eq.s32.totalorder %v509, 2
        %v515 = vxor.u32 %v506, 2147483648
        %v516 = vsel %vm514, %v515, %v507
        %v517 = vsel %vm510, %v513, %v516
        %v518 = vsel %vm508, nan, %v517
        %v519 = vand.u32 2147483647, %v415
        %vm520 = vcmp.le.f32.partialorder %v519, 0.7853982
        %vm521 = vcmp.lt.s32.totalorder %v415, 0
        %v522 = vand.u32 %v415, 2139095040
        %v523 = vshrl.u32 %v522, 23
        %v524 = vsub.s32 %v523, 127
        %v525 = vand.u32 2147483647, %v415
        %v526 = vand.u32 %v525, 8388607
        %v527 = vor.u32 %v526, 8388608
        %v528 = vsub.s32 0, %v527
        %v529 = vadd.s32 %v524, 1
        %vm530 = vcmp.gt.s32.totalorder %v529, 0
        %v531 = vsel %vm530, %v529, 0
        %v532 = vshrl.u32 %v531, 5
        %v533 = vand.u32 %v531, 31
        %v534 = vsub.s32 32, %v533
        %v535 = vshrl.u32 683565275, %v534
        %v536 = vshll.u32 683565275, %v533
        %v537 = vshrl.u32 2475754826, %v534
        %v538 = vor.u32 %v536, %v537
        %v539 = vshll.u32 2475754826, %v533
        %v540 = vshrl.u32 2131351028, %v534
        %v541 = vor.u32 %v539, %v540
        %v542 = vshll.u32 2131351028, %v533
        %v543 = vshrl.u32 2102212464, %v534
        %v544 = vor.u32 %v542, %v543
        %v545 = vshll.u32 2102212464, %v533
        %v546 = vshrl.u32 920167782, %v534
        %v547 = vor.u32 %v545, %v546
        %v548 = vshll.u32 920167782, %v533
        %v549 = vshrl.u32 1326507024, %v534
        %v550 = vor.u32 %v548, %v549
        %vm551 = vcmp.lt.s32.totalorder %v532, 1
        %vm552 = vcmp.lt.s32.totalorder %v532, 2
        %vm553 = vcmp.lt.s32.totalorder %v532, 3
        %vm554 = vcmp.lt.s32.totalorder %v532, 4
        %v555 = vsel %vm551, %v535, %v538
        %v556 = vsel %vm554, %v544, 2102212464
        %v557 = vsel %vm553, %v541, %v556
        %v558 = vsel %vm552, %v555, %v557
        %v559 = vsel %vm551, %v538, %v541
        %v560 = vsel %vm554, %v547, 920167782
        %v561 = vsel %vm553, %v544, %v560
        %v562 = vsel %vm552, %v559, %v561
        %v563 = vsel %vm551, %v541, %v544
        %v564 = vsel %vm554, %v550, 1326507024
        %v565 = vsel %vm553, %v547, %v564
        %v566 = vsel %vm552, %v563, %v565
        %v567 = vshll.u32 %v527, 8
        %v568 = vmul.u32.u64.compose %v567, %v566
        %v569 = vextract.low.u32 %v568
        %v570 = vextract.high.u32 %v568
        %v571 = vmul.u32.u64.compose %v567, %v562
        %v572 = vextract.low.u32 %v571
        %v573 = vextract.high.u32 %v571
        %v574 = vmul.u32 %v567, %v558
        %v575 = vadd.s32 %v570, %v572
        %vm576 = vc.u32 %v570, %v572
        %v577 = vadd.s32 %v573, 1
        %v578 = vsel %vm576, %v577, %v573
        %v579 = vadd.s32 %v574, %v578
        %v580 = vadd.s32 %v579, 536870912
        %v581 = vshrl.u32 %v580, 30
        %v582 = vshll.u32 %v581, 30
        %v583 = vsub.s32 %v579, %v582
        %vm584 = vcmp.lt.s32.totalorder %v583, 0
        %v585 = vsub.s32 0, %v583
        %v586 = vsel %vm584, %v585, %v583
        %v587 = vclz %v586
        %v588 = vsub.s32 %v587, 2
        %vm589 = vcmp.gt.s32.totalorder 0, %v588
        %v590 = vsel %vm589, 0, %v588
        %v591 = vsub.s32 32, %v590
        %v592 = vshll.u32 %v583, %v590
        %v593 = vshrl.u32 %v575, %v591
        %v594 = vor.u32 %v592, %v593
        %v595 = vsub.s32 4294967266, %v590
        %v596 = vadd.s32 %v595, 127
        %v597 = vshll.u32 %v596, 23
        %v598 = vor.u32 4788187, %v597
        %v599 = vand.u32 2147483647, %v598
        %v601 = vcvt.s32.f32 %v594
        %v602 = vmul.f32 %v601, %v599
        %v603 = vxor.u32 %v602, 2147483648
        %v604 = vsel %vm521, %v603, %v602
        %v605 = vsub.s32 4, %v581
        %v606 = vsel %vm521, %v605, %v581
        %v607 = vsel %vm520, %v415, %v604
        %v608 = vsel %vm520, 0, %v606
        %v609 = vcosq.f32.pop %v607
        %v610 = vsinq.f32.pop %v607
        %vm611 = vweird.f32 %v415
        %v612 = vadd.s32 %v608, 3
        %v613 = vand.u32 %v612, 3
        %vm614 = vcmp.lt.s32.totalorder %v613, 2
        %vm615 = vcmp.eq.s32.totalorder %v613, 0
        %v616 = vxor.u32 %v610, 2147483648
        %v617 = vsel %vm615, %v609, %v616
        %vm618 = vcmp.eq.s32.totalorder %v613, 2
        %v619 = vxor.u32 %v609, 2147483648
        %v620 = vsel %vm618, %v619, %v610
        %v621 = vsel %vm614, %v617, %v620
        %v622 = vsel %vm611, nan, %v621
        %v623 = vpack.c.bf16 %v518, %v518
        %v624 = vpack.c.bf16 %v622, %v622
        %v625 = vld [vmem:[%s311] sm:$0xff]
        %v626 = vld [vmem:[%s311 + $0x8] sm:$0xff]
        %v627 = vld [vmem:[%s311 + $0x10] sm:$0xff]
        %v628 = vld [vmem:[%s311 + $0x18] sm:$0xff]
        %v629 = vld [vmem:[%s311 + $0x20] sm:$0xff]
        %v630 = vld [vmem:[%s311 + $0x28] sm:$0xff]
        %v631 = vld [vmem:[%s311 + $0x30] sm:$0xff]
        %v632 = vld [vmem:[%s311 + $0x38] sm:$0xff]
        %v633 = vld [vmem:[%s311 + $0x40] sm:$0xff]
        %v634 = vld [vmem:[%s311 + $0x48] sm:$0xff]
        %v635 = vld [vmem:[%s311 + $0x50] sm:$0xff]
        %v636 = vld [vmem:[%s311 + $0x58] sm:$0xff]
        %v637 = vld [vmem:[%s311 + $0x60] sm:$0xff]
        %v638 = vld [vmem:[%s311 + $0x68] sm:$0xff]
        %v639 = vld [vmem:[%s311 + $0x70] sm:$0xff]
        %v640 = vld [vmem:[%s311 + $0x78] sm:$0xff]
        %v641 = vld [vmem:[%s311 + $0x80] sm:$0xff]
        %v642 = vld [vmem:[%s311 + $0x88] sm:$0xff]
        %v643 = vld [vmem:[%s311 + $0x90] sm:$0xff]
        %v644 = vld [vmem:[%s311 + $0x98] sm:$0xff]
        %v645 = vld [vmem:[%s311 + $0xa0] sm:$0xff]
        %v646 = vld [vmem:[%s311 + $0xa8] sm:$0xff]
        %v647 = vld [vmem:[%s311 + $0xb0] sm:$0xff]
        %v648 = vld [vmem:[%s311 + $0xb8] sm:$0xff]
        %v649 = vld [vmem:[%s311 + $0xc0] sm:$0xff]
        %v650 = vld [vmem:[%s311 + $0xc8] sm:$0xff]
        %v651 = vld [vmem:[%s311 + $0xd0] sm:$0xff]
        %v652 = vld [vmem:[%s311 + $0xd8] sm:$0xff]
        %v653 = vld [vmem:[%s311 + $0xe0] sm:$0xff]
        %v654 = vld [vmem:[%s311 + $0xe8] sm:$0xff]
        %v655 = vld [vmem:[%s311 + $0xf0] sm:$0xff]
        %v656 = vld [vmem:[%s311 + $0xf8] sm:$0xff]
        %v657 = vld [vmem:[%s379] sm:$0x3]
        %v659 = vlaneseq
        %v660 = vshrl.u32 %v659, 7
        %v661 = vsub.s32 0, %v660
        %v662 = vrot.slane %v657, %v661
        %v663 = vlaneseq
        %v664 = vshrl.u32 %v663, 7
        %v665 = vsub.s32 1, %v664
        %v666 = vrot.slane %v657, %v665
        %v701 = vunpack.c.l.b16 %v625
        %v702 = vunpack.c.h.b16 %v625
        %v703 = vunpack.c.l.b16 %v626
        %v704 = vunpack.c.h.b16 %v626
        %v705 = vunpack.c.l.b16 %v627
        %v706 = vunpack.c.h.b16 %v627
        %v707 = vunpack.c.l.b16 %v628
        %v708 = vunpack.c.h.b16 %v628
        %v709 = vunpack.c.l.b16 %v629
        %v710 = vunpack.c.h.b16 %v629
        %v711 = vunpack.c.l.b16 %v630
        %v712 = vunpack.c.h.b16 %v630
        %v713 = vunpack.c.l.b16 %v631
        %v714 = vunpack.c.h.b16 %v631
        %v715 = vunpack.c.l.b16 %v632
        %v716 = vunpack.c.h.b16 %v632
        %v717 = vunpack.c.l.b16 %v633
        %v718 = vunpack.c.h.b16 %v633
        %v719 = vunpack.c.l.b16 %v634
        %v720 = vunpack.c.h.b16 %v634
        %v721 = vunpack.c.l.b16 %v635
        %v722 = vunpack.c.h.b16 %v635
        %v723 = vunpack.c.l.b16 %v636
        %v724 = vunpack.c.h.b16 %v636
        %v725 = vunpack.c.l.b16 %v637
        %v726 = vunpack.c.h.b16 %v637
        %v727 = vunpack.c.l.b16 %v638
        %v728 = vunpack.c.h.b16 %v638
        %v729 = vunpack.c.l.b16 %v639
        %v730 = vunpack.c.h.b16 %v639
        %v731 = vunpack.c.l.b16 %v640
        %v732 = vunpack.c.h.b16 %v640
        %v733 = vunpack.c.l.b16 %v641
        %v734 = vunpack.c.h.b16 %v641
        %v735 = vunpack.c.l.b16 %v642
        %v736 = vunpack.c.h.b16 %v642
        %v737 = vunpack.c.l.b16 %v643
        %v738 = vunpack.c.h.b16 %v643
        %v739 = vunpack.c.l.b16 %v644
        %v740 = vunpack.c.h.b16 %v644
        %v741 = vunpack.c.l.b16 %v645
        %v742 = vunpack.c.h.b16 %v645
        %v743 = vunpack.c.l.b16 %v646
        %v744 = vunpack.c.h.b16 %v646
        %v745 = vunpack.c.l.b16 %v647
        %v746 = vunpack.c.h.b16 %v647
        %v747 = vunpack.c.l.b16 %v648
        %v748 = vunpack.c.h.b16 %v648
        %v749 = vunpack.c.l.b16 %v649
        %v750 = vunpack.c.h.b16 %v649
        %v751 = vunpack.c.l.b16 %v650
        %v752 = vunpack.c.h.b16 %v650
        %v753 = vunpack.c.l.b16 %v651
        %v754 = vunpack.c.h.b16 %v651
        %v755 = vunpack.c.l.b16 %v652
        %v756 = vunpack.c.h.b16 %v652
        %v757 = vunpack.c.l.b16 %v653
        %v758 = vunpack.c.h.b16 %v653
        %v759 = vunpack.c.l.b16 %v654
        %v760 = vunpack.c.h.b16 %v654
        %v761 = vunpack.c.l.b16 %v655
        %v762 = vunpack.c.h.b16 %v655
        %v763 = vunpack.c.l.b16 %v656
        %v764 = vunpack.c.h.b16 %v656
        %v765 = vpack.c.b16 %v703, %v701
        %v766 = vpack.c.b16 %v704, %v702
        %v767 = vpack.c.b16 %v707, %v705
        %v768 = vpack.c.b16 %v708, %v706
        %v769 = vpack.c.b16 %v711, %v709
        %v770 = vpack.c.b16 %v712, %v710
        %v771 = vpack.c.b16 %v715, %v713
        %v772 = vpack.c.b16 %v716, %v714
        %v773 = vpack.c.b16 %v719, %v717
        %v774 = vpack.c.b16 %v720, %v718
        %v775 = vpack.c.b16 %v723, %v721
        %v776 = vpack.c.b16 %v724, %v722
        %v777 = vpack.c.b16 %v727, %v725
        %v778 = vpack.c.b16 %v728, %v726
        %v779 = vpack.c.b16 %v731, %v729
        %v780 = vpack.c.b16 %v732, %v730
        %v781 = vpack.c.b16 %v735, %v733
        %v782 = vpack.c.b16 %v736, %v734
        %v783 = vpack.c.b16 %v739, %v737
        %v784 = vpack.c.b16 %v740, %v738
        %v785 = vpack.c.b16 %v743, %v741
        %v786 = vpack.c.b16 %v744, %v742
        %v787 = vpack.c.b16 %v747, %v745
        %v788 = vpack.c.b16 %v748, %v746
        %v789 = vpack.c.b16 %v751, %v749
        %v790 = vpack.c.b16 %v752, %v750
        %v791 = vpack.c.b16 %v755, %v753
        %v792 = vpack.c.b16 %v756, %v754
        %v793 = vpack.c.b16 %v759, %v757
        %v794 = vpack.c.b16 %v760, %v758
        %v795 = vpack.c.b16 %v763, %v761
        %v796 = vpack.c.b16 %v764, %v762
        %829 = vmatprep.subr.bf16.mxu0 %v766
        %830 = vmatpush1.bf16.msra.mxu0 %v765
        %831 = vmatprep.subr.bf16.mxu0 %v768
        %832 = vmatpush1.bf16.msra.mxu0 %v767
        %833 = vmatprep.subr.bf16.mxu0 %v770
        %834 = vmatpush1.bf16.msra.mxu0 %v769
        %835 = vmatprep.subr.bf16.mxu0 %v772
        %836 = vmatpush1.bf16.msra.mxu0 %v771
        %837 = vmatprep.subr.bf16.mxu0 %v774
        %838 = vmatpush1.bf16.msra.mxu0 %v773
        %839 = vmatprep.subr.bf16.mxu0 %v776
        %840 = vmatpush1.bf16.msra.mxu0 %v775
        %841 = vmatprep.subr.bf16.mxu0 %v778
        %842 = vmatpush1.bf16.msra.mxu0 %v777
        %843 = vmatprep.subr.bf16.mxu0 %v780
        %844 = vmatpush1.bf16.msra.mxu0 %v779
        %845 = vmatprep.subr.bf16.mxu0 %v782
        %846 = vmatpush1.bf16.msra.mxu0 %v781
        %847 = vmatprep.subr.bf16.mxu0 %v784
        %848 = vmatpush1.bf16.msra.mxu0 %v783
        %849 = vmatprep.subr.bf16.mxu0 %v786
        %850 = vmatpush1.bf16.msra.mxu0 %v785
        %851 = vmatprep.subr.bf16.mxu0 %v788
        %852 = vmatpush1.bf16.msra.mxu0 %v787
        %853 = vmatprep.subr.bf16.mxu0 %v790
        %854 = vmatpush1.bf16.msra.mxu0 %v789
        %855 = vmatprep.subr.bf16.mxu0 %v792
        %856 = vmatpush1.bf16.msra.mxu0 %v791
        %857 = vmatprep.subr.bf16.mxu0 %v794
        %858 = vmatpush1.bf16.msra.mxu0 %v793
        %859 = vmatprep.subr.bf16.mxu0 %v796
        %860 = vmatpush1.bf16.msra.mxu0 %v795
        %861 = vmatprep.mubr.bf16.mxu0 %v624
        %862 = vmatmul.mubr.bf16.gmra.mrb[0].mxu0 %v623
        %v863 = vpop.f32.mrb[0].mxu0
        %v864 = vadd.f32 %v662, %v863
        %v865 = vpop.f32.mrb[0].mxu0
        %v866 = vadd.f32 %v666, %v865
        %v867 = vpop.f32.mrb[0].mxu0
        %v868 = vpop.f32.mrb[0].mxu0
        %869 = vdwg.mxu0
        %v870 = vmax.f32 %v864, 0.0
        %v871 = vmax.f32 %v866, 0.0
        %v872 = vld [vmem:[#allocation2] sm:$0xff]
        %v873 = vpack.c.bf16 %v870, %v870
        %v874 = vpack.c.bf16 %v871, %v871
        %v875 = vld [vmem:[%s320] sm:$0xf]
        %v876 = vld [vmem:[%s320 + $0x4] sm:$0xf]
        %v877 = vld [vmem:[%s320 + $0x8] sm:$0xf]
        %v878 = vld [vmem:[%s320 + $0xc] sm:$0xf]
        %v879 = vld [vmem:[%s320 + $0x10] sm:$0xf]
        %v880 = vld [vmem:[%s320 + $0x14] sm:$0xf]
        %v881 = vld [vmem:[%s320 + $0x18] sm:$0xf]
        %v882 = vld [vmem:[%s320 + $0x1c] sm:$0xf]
        %v883 = vld [vmem:[%s320 + $0x20] sm:$0xf]
        %v884 = vld [vmem:[%s320 + $0x24] sm:$0xf]
        %v885 = vld [vmem:[%s320 + $0x28] sm:$0xf]
        %v886 = vld [vmem:[%s320 + $0x2c] sm:$0xf]
        %v887 = vld [vmem:[%s320 + $0x30] sm:$0xf]
        %v888 = vld [vmem:[%s320 + $0x34] sm:$0xf]
        %v889 = vld [vmem:[%s320 + $0x38] sm:$0xf]
        %v890 = vld [vmem:[%s320 + $0x3c] sm:$0xf]
        %v891 = vld [vmem:[%s320 + $0x40] sm:$0xf]
        %v892 = vld [vmem:[%s320 + $0x44] sm:$0xf]
        %v893 = vld [vmem:[%s320 + $0x48] sm:$0xf]
        %v894 = vld [vmem:[%s320 + $0x4c] sm:$0xf]
        %v895 = vld [vmem:[%s320 + $0x50] sm:$0xf]
        %v896 = vld [vmem:[%s320 + $0x54] sm:$0xf]
        %v897 = vld [vmem:[%s320 + $0x58] sm:$0xf]
        %v898 = vld [vmem:[%s320 + $0x5c] sm:$0xf]
        %v899 = vld [vmem:[%s320 + $0x60] sm:$0xf]
        %v900 = vld [vmem:[%s320 + $0x64] sm:$0xf]
        %v901 = vld [vmem:[%s320 + $0x68] sm:$0xf]
        %v902 = vld [vmem:[%s320 + $0x6c] sm:$0xf]
        %v903 = vld [vmem:[%s320 + $0x70] sm:$0xf]
        %v904 = vld [vmem:[%s320 + $0x74] sm:$0xf]
        %v905 = vld [vmem:[%s320 + $0x78] sm:$0xf]
        %v906 = vld [vmem:[%s320 + $0x7c] sm:$0xf]
        %v907 = vld [vmem:[%s382] sm:$0x1]
        %v909 = vlaneseq
        %v910 = vshrl.u32 %v909, 7
        %v911 = vsub.s32 0, %v910
        %v912 = vrot.slane %v907, %v911
        %v946 = vunpack.c.l.b16 %v875
        %v947 = vunpack.c.l.b16 %v876
        %v948 = vunpack.c.l.b16 %v877
        %v949 = vunpack.c.l.b16 %v878
        %v950 = vunpack.c.l.b16 %v879
        %v951 = vunpack.c.l.b16 %v880
        %v952 = vunpack.c.l.b16 %v881
        %v953 = vunpack.c.l.b16 %v882
        %v954 = vunpack.c.l.b16 %v883
        %v955 = vunpack.c.l.b16 %v884
        %v956 = vunpack.c.l.b16 %v885
        %v957 = vunpack.c.l.b16 %v886
        %v958 = vunpack.c.l.b16 %v887
        %v959 = vunpack.c.l.b16 %v888
        %v960 = vunpack.c.l.b16 %v889
        %v961 = vunpack.c.l.b16 %v890
        %v962 = vunpack.c.l.b16 %v891
        %v963 = vunpack.c.l.b16 %v892
        %v964 = vunpack.c.l.b16 %v893
        %v965 = vunpack.c.l.b16 %v894
        %v966 = vunpack.c.l.b16 %v895
        %v967 = vunpack.c.l.b16 %v896
        %v968 = vunpack.c.l.b16 %v897
        %v969 = vunpack.c.l.b16 %v898
        %v970 = vunpack.c.l.b16 %v899
        %v971 = vunpack.c.l.b16 %v900
        %v972 = vunpack.c.l.b16 %v901
        %v973 = vunpack.c.l.b16 %v902
        %v974 = vunpack.c.l.b16 %v903
        %v975 = vunpack.c.l.b16 %v904
        %v976 = vunpack.c.l.b16 %v905
        %v977 = vunpack.c.l.b16 %v906
        %v978 = vpack.c.b16 %v947, %v946
        %v979 = vpack.c.b16 %v949, %v948
        %v980 = vpack.c.b16 %v951, %v950
        %v981 = vpack.c.b16 %v953, %v952
        %v982 = vpack.c.b16 %v955, %v954
        %v983 = vpack.c.b16 %v957, %v956
        %v984 = vpack.c.b16 %v959, %v958
        %v985 = vpack.c.b16 %v961, %v960
        %v986 = vpack.c.b16 %v963, %v962
        %v987 = vpack.c.b16 %v965, %v964
        %v988 = vpack.c.b16 %v967, %v966
        %v989 = vpack.c.b16 %v969, %v968
        %v990 = vpack.c.b16 %v971, %v970
        %v991 = vpack.c.b16 %v973, %v972
        %v992 = vpack.c.b16 %v975, %v974
        %v993 = vpack.c.b16 %v977, %v976
        %1010 = vmatprep.subr.bf16.mxu0 0
        %1011 = vmatpush1.bf16.msra.mxu0 %v978
        %1012 = vmatprep.subr.bf16.mxu0 0
        %1013 = vmatpush1.bf16.msra.mxu0 %v979
        %1014 = vmatprep.subr.bf16.mxu0 0
        %1015 = vmatpush1.bf16.msra.mxu0 %v980
        %1016 = vmatprep.subr.bf16.mxu0 0
        %1017 = vmatpush1.bf16.msra.mxu0 %v981
        %1018 = vmatprep.subr.bf16.mxu0 0
        %1019 = vmatpush1.bf16.msra.mxu0 %v982
        %1020 = vmatprep.subr.bf16.mxu0 0
        %1021 = vmatpush1.bf16.msra.mxu0 %v983
        %1022 = vmatprep.subr.bf16.mxu0 0
        %1023 = vmatpush1.bf16.msra.mxu0 %v984
        %1024 = vmatprep.subr.bf16.mxu0 0
        %1025 = vmatpush1.bf16.msra.mxu0 %v985
        %1026 = vmatprep.subr.bf16.mxu0 0
        %1027 = vmatpush1.bf16.msra.mxu0 %v986
        %1028 = vmatprep.subr.bf16.mxu0 0
        %1029 = vmatpush1.bf16.msra.mxu0 %v987
        %1030 = vmatprep.subr.bf16.mxu0 0
        %1031 = vmatpush1.bf16.msra.mxu0 %v988
        %1032 = vmatprep.subr.bf16.mxu0 0
        %1033 = vmatpush1.bf16.msra.mxu0 %v989
        %1034 = vmatprep.subr.bf16.mxu0 0
        %1035 = vmatpush1.bf16.msra.mxu0 %v990
        %1036 = vmatprep.subr.bf16.mxu0 0
        %1037 = vmatpush1.bf16.msra.mxu0 %v991
        %1038 = vmatprep.subr.bf16.mxu0 0
        %1039 = vmatpush1.bf16.msra.mxu0 %v992
        %1040 = vmatprep.subr.bf16.mxu0 0
        %1041 = vmatpush1.bf16.msra.mxu0 %v993
        %1042 = vmatprep.mubr.bf16.mxu0 %v874
        %1043 = vmatmul.mubr.bf16.gmra.mrb[0].mxu0 %v873
        %v1044 = vpop.f32.mrb[0].mxu0
        %v1045 = vadd.f32 %v912, %v1044
        %v1046 = vpop.f32.mrb[0].mxu0
        %v1047 = vpop.f32.mrb[0].mxu0
        %v1048 = vpop.f32.mrb[0].mxu0
        %1049 = vdwg.mxu0
        %v1050 = vadd.f32 %v872, %v1045
        %1051 = vst [vmem:[#allocation2] sm:$0xff] %v1050
        %p1052 = scmp.eq.s32.totalorder %s28, 2
        // Predicated region
        $region57: #{geoclip_forward.4} parent=43 // pred_check
          %p1053 = pneg %p1052
        $region58: #{geoclip_forward.4} parent=43 // pred_check_branch
          %1055 = sbr.rel (%p1053) target = $region60
        $region59: #{geoclip_forward.4} parent=43 // pred_region
          %v1056 = vld [vmem:[#allocation2] sm:$0xff]
          %v1057 = vmul.f32 %v1056, %v1056
          %1058 = vadd.xlane.f32.xlu0 %v1057
          %v1059 = vpop.xlane.xlu0 %1058
          %v1060 = vmax.f32 %v1059, 1e-24
          %v1061 = vrsqrt.pop %v1060
          %v1062 = vmul.f32 %v1056, %v1061
          %1063 = vst [vmem:[%s386] sm:$0xff] %v1062
        $region60: #{geoclip_forward.4} parent=43 // pred_fallthru
          _
        %p1064 = scmp.lt.s32.totalorder %s27, 0
        %s1065 = scalar_select %p1064, %s27, 0
        %s1066 = smul.addr %s1065, 8
        %s1067 = scalar_lea.vmem %s6, %s1066
        // Predicated region
        $region61: #{geoclip_forward.4} parent=43 // pred_check
          %p1068 = pneg %p209
        $region62: #{geoclip_forward.4} parent=43 // pred_check_branch
          %1070 = sbr.rel (%p1068) target = $region64
        $region63: #{geoclip_forward.4} parent=43 // pred_region
          _
        $region64: #{geoclip_forward.4} parent=43 // pred_fallthru
          _
        // Predicated region
        $region65: #{geoclip_forward.4} parent=43 // pred_check
          %p1071 = pneg %p209
        $region66: #{geoclip_forward.4} parent=43 // pred_check_branch
          %1073 = sbr.rel (%p1071) target = $region68
        $region67: #{geoclip_forward.4} parent=43 // pred_region
          %p1074 = scmp.lt.s32.totalorder %s27, 0
          %s1075 = scalar_select %p1074, %s27, 0
          %s1076 = smul.addr %s1075, 8
          %s1077 = scalar_lea.vmem %s6, %s1076
        $region68: #{geoclip_forward.4} parent=43 // pred_fallthru
          _
      $region44: #{geoclip_forward.4} parent=5 // pred_fallthru
        _
      %p1078 = scmp.le.s32.totalorder 2, %s18
      // Predicated region
      $region69: #{geoclip_forward.4} parent=5 // pred_check
        %p1079 = pneg %p1078
      $region70: #{geoclip_forward.4} parent=5 // pred_check_branch
        %1081 = sbr.rel (%p1079) target = $region72
      $region71: #{geoclip_forward.4} parent=5 // pred_region
        %s1082 = ssub.s32 %s18, 2
      $region72: #{geoclip_forward.4} parent=5 // pred_fallthru
        _
    $region6: #{geoclip_forward.4} parent=1 // loop_footer
      %s22 = sadd.s32 1, %s18
    $region7: #{geoclip_forward.4} parent=1 // loop_footer_branch
      %17 = sbr.rel target = $region3
    $region8: #{geoclip_forward.4} parent=1 // loop_exit
      _
    %1083 = vsyncpa [#allocation4], 1
    %s1084 = scalar_lea.sflag [#allocation4], 1
    %1085 = vsyncpa %s1084, 1
    %1086 = vsyncpa [#allocation6], 1
    %s1087 = scalar_lea.sflag [#allocation6], 1
    %1088 = vsyncpa %s1087, 1

// kernel: geoclip_forward.3
$region0: #{geoclip_forward.3}
  #allocation0 [shape = 'u32[]', space=smem, size = 0x4, offset = 0x4, fixed_abs, tag = 'smem constant byte address 0x4 - core index']
  #allocation1 [shape = 'u32[144,128]{1,0:T(1,128)}', space=vmem, size = 0x12000, scoped, tag = 'internal scratch']
  #allocation2 [shape = 'f32[8,256]{1,0:T(8,128)}', space=vmem, size = 0x2000, scoped, tag = 'scratch operand']
  %s0 = inlined_call_operand.vmem [shape: bf16[8,1024], index: 0, kind: input, shape index: {}]
  %s1 = inlined_call_operand.vmem [shape: bf16[1024,256], index: 1, kind: input, shape index: {}]
  %s2 = inlined_call_operand.vmem [shape: f32[1,256], index: 2, kind: input, shape index: {}]
  %s3 = inlined_call_operand.vmem [shape: bf16[256,128], index: 3, kind: input, shape index: {}]
  %s4 = inlined_call_operand.vmem [shape: f32[1,128], index: 4, kind: input, shape index: {}]
  %s5 = inlined_call_operand.vmem [shape: f32[8,128], index: 5, kind: output, shape index: {}]
  %s6 = sld [smem:[#allocation0]]
  $region61: #{geoclip_forward.3} parent=0
    _
  %s8 = ssub.s32 1, %s6
  %s9 = scalar_select 0, %s8, %s6
  loop: start=0, step=1, limit=4
  $region2: #{geoclip_forward.3} parent=0 // loop_pre_header
    _
  $region3: #{geoclip_forward.3} parent=0 // loop_header
    %s11 = sphi 0, %s15
    %p12 = scmp.ge.s32.totalorder %s11, 4
    %s18 = sphi 0, %s30
    %s19 = sphi 0, %s26
    %s20 = sphi 0, %s18
    %s21 = sphi 0, %s19
    %s22 = sphi 0, %s20
    %s23 = sphi 0, %s21
    %s35 = sphi 0, %s37
    %s38 = sphi 0, %s35
    %s39 = sphi 0, %s38
    %s55 = sphi 0, %s39
    %s61 = sphi 0, %s63
    %s64 = sphi 0, %s61
    %s65 = sphi 0, %s64
    %s81 = sphi 0, %s65
    %s85 = sphi 0, %s85
    %s87 = sphi 0, %s85
    %s88 = sphi 0, %s87
    %s102 = sphi 0, %s88
    %s106 = sphi 0, %s106
    %s108 = sphi 0, %s106
    %s109 = sphi 0, %s108
    %s123 = sphi 0, %s109
    %s127 = sphi 0, %s127
    %s129 = sphi 0, %s127
    %s130 = sphi 0, %s129
    %s144 = sphi 0, %s130
    %s150 = sphi 0, %s152
    %s153 = sphi 0, %s150
    %s154 = sphi 0, %s153
    %s170 = sphi 0, %s154
  $region4: #{geoclip_forward.3} parent=0 // loop_header_branch
    %14 = sbr.rel (%p12) target = $region8
  $region5: #{geoclip_forward.3} parent=0 // loop_body
    %s16 = ssub.s32 %s11, 1
    %s17 = ssub.s32 %s11, 2
    %s24 = sadd.s32 1, %s19
    %p25 = scmp.ge.s32.totalorder %s24, 2
    %s26 = scalar_select %p25, 0, %s24
    %s27 = sadd.s32 1, %s18
    %s28 = scalar_select %p25, %s27, %s18
    %p29 = scmp.ge.s32.totalorder %s28, 1
    %s30 = scalar_select %p29, 0, %s28
    %s31 = ssub.s32 %s18, %s30
    %s32 = ssub.s32 %s19, %s26
    %s33 = sor.u32 %s31, %s32
    %p34 = scmp.eq.s32.totalorder %s33, 0
    %s36 = sadd.s32 %s35, 1
    %s37 = scalar_select %p34, %s35, %s36
    %p40 = pneg %p34
    %p41 = scmp.eq.s32.totalorder %s11, 1
    %p42 = por %p40, %p41
    %p43 = scmp.ne.s32.totalorder %s35, %s38
    %p44 = scmp.eq.s32.totalorder %s11, 0
    %p45 = por %p43, %p44
    %p46 = scmp.ne.s32.totalorder %s35, %s38
    %p47 = scmp.eq.s32.totalorder %s16, 1
    %p48 = por %p46, %p47
    %p49 = scmp.ne.s32.totalorder %s38, %s39
    %p50 = scmp.eq.s32.totalorder %s16, 0
    %p51 = por %p49, %p50
    %p52 = scmp.ne.s32.totalorder %s38, %s39
    %p53 = scmp.eq.s32.totalorder %s17, 1
    %p54 = por %p52, %p53
    %p56 = scmp.ne.s32.totalorder %s39, %s55
    %p57 = scmp.eq.s32.totalorder %s17, 0
    %p58 = por %p56, %p57
    %s59 = ssub.s32 %s19, %s26
    %p60 = scmp.eq.s32.totalorder %s59, 0
    %s62 = sadd.s32 %s61, 1
    %s63 = scalar_select %p60, %s61, %s62
    %p66 = pneg %p60
    %p67 = scmp.eq.s32.totalorder %s11, 1
    %p68 = por %p66, %p67
    %p69 = scmp.ne.s32.totalorder %s61, %s64
    %p70 = scmp.eq.s32.totalorder %s11, 0
    %p71 = por %p69, %p70
    %p72 = scmp.ne.s32.totalorder %s61, %s64
    %p73 = scmp.eq.s32.totalorder %s16, 1
    %p74 = por %p72, %p73
    %p75 = scmp.ne.s32.totalorder %s64, %s65
    %p76 = scmp.eq.s32.totalorder %s16, 0
    %p77 = por %p75, %p76
    %p78 = scmp.ne.s32.totalorder %s64, %s65
    %p79 = scmp.eq.s32.totalorder %s17, 1
    %p80 = por %p78, %p79
    %p82 = scmp.ne.s32.totalorder %s65, %s81
    %p83 = scmp.eq.s32.totalorder %s17, 0
    %p84 = por %p82, %p83
    %s86 = sadd.s32 %s85, 1
    %p89 = scmp.eq.s32.totalorder %s11, 1
    %p90 = scmp.ne.s32.totalorder %s85, %s87
    %p91 = scmp.eq.s32.totalorder %s11, 0
    %p92 = por %p90, %p91
    %p93 = scmp.ne.s32.totalorder %s85, %s87
    %p94 = scmp.eq.s32.totalorder %s16, 1
    %p95 = por %p93, %p94
    %p96 = scmp.ne.s32.totalorder %s87, %s88
    %p97 = scmp.eq.s32.totalorder %s16, 0
    %p98 = por %p96, %p97
    %p99 = scmp.ne.s32.totalorder %s87, %s88
    %p100 = scmp.eq.s32.totalorder %s17, 1
    %p101 = por %p99, %p100
    %p103 = scmp.ne.s32.totalorder %s88, %s102
    %p104 = scmp.eq.s32.totalorder %s17, 0
    %p105 = por %p103, %p104
    %s107 = sadd.s32 %s106, 1
    %p110 = scmp.eq.s32.totalorder %s11, 1
    %p111 = scmp.ne.s32.totalorder %s106, %s108
    %p112 = scmp.eq.s32.totalorder %s11, 0
    %p113 = por %p111, %p112
    %p114 = scmp.ne.s32.totalorder %s106, %s108
    %p115 = scmp.eq.s32.totalorder %s16, 1
    %p116 = por %p114, %p115
    %p117 = scmp.ne.s32.totalorder %s108, %s109
    %p118 = scmp.eq.s32.totalorder %s16, 0
    %p119 = por %p117, %p118
    %p120 = scmp.ne.s32.totalorder %s108, %s109
    %p121 = scmp.eq.s32.totalorder %s17, 1
    %p122 = por %p120, %p121
    %p124 = scmp.ne.s32.totalorder %s109, %s123
    %p125 = scmp.eq.s32.totalorder %s17, 0
    %p126 = por %p124, %p125
    %s128 = sadd.s32 %s127, 1
    %p131 = scmp.eq.s32.totalorder %s11, 1
    %p132 = scmp.ne.s32.totalorder %s127, %s129
    %p133 = scmp.eq.s32.totalorder %s11, 0
    %p134 = por %p132, %p133
    %p135 = scmp.ne.s32.totalorder %s127, %s129
    %p136 = scmp.eq.s32.totalorder %s16, 1
    %p137 = por %p135, %p136
    %p138 = scmp.ne.s32.totalorder %s129, %s130
    %p139 = scmp.eq.s32.totalorder %s16, 0
    %p140 = por %p138, %p139
    %p141 = scmp.ne.s32.totalorder %s129, %s130
    %p142 = scmp.eq.s32.totalorder %s17, 1
    %p143 = por %p141, %p142
    %p145 = scmp.ne.s32.totalorder %s130, %s144
    %p146 = scmp.eq.s32.totalorder %s17, 0
    %p147 = por %p145, %p146
    %s148 = ssub.s32 %s18, %s30
    %p149 = scmp.eq.s32.totalorder %s148, 0
    %s151 = sadd.s32 %s150, 1
    %s152 = scalar_select %p149, %s150, %s151
    %p155 = pneg %p149
    %p156 = scmp.eq.s32.totalorder %s11, 1
    %p157 = por %p155, %p156
    %p158 = scmp.ne.s32.totalorder %s150, %s153
    %p159 = scmp.eq.s32.totalorder %s11, 0
    %p160 = por %p158, %p159
    %p161 = scmp.ne.s32.totalorder %s150, %s153
    %p162 = scmp.eq.s32.totalorder %s16, 1
    %p163 = por %p161, %p162
    %p164 = scmp.ne.s32.totalorder %s153, %s154
    %p165 = scmp.eq.s32.totalorder %s16, 0
    %p166 = por %p164, %p165
    %p167 = scmp.ne.s32.totalorder %s153, %s154
    %p168 = scmp.eq.s32.totalorder %s17, 1
    %p169 = por %p167, %p168
    %p171 = scmp.ne.s32.totalorder %s154, %s170
    %p172 = scmp.eq.s32.totalorder %s17, 0
    %p173 = por %p171, %p172
    %p174 = scmp.le.s32.totalorder 1, %s11
    %p175 = scmp.lt.s32.totalorder %s11, 3
    %p176 = pnand %p174, %p175
    %p177 = pneg %p176
    // Predicated region
    $region9: #{geoclip_forward.3} parent=5 // pred_check
      _
    $region10: #{geoclip_forward.3} parent=5 // pred_check_branch
      %179 = sbr.rel (%p176) target = $region12
    $region11: #{geoclip_forward.3} parent=5 // pred_region
      %s180 = ssub.s32 %s11, 1
      // Predicated region
      $region13: #{geoclip_forward.3} parent=11 // pred_check
        %p181 = pneg %p98
      $region14: #{geoclip_forward.3} parent=11 // pred_check_branch
        %183 = sbr.rel (%p181) target = $region16
      $region15: #{geoclip_forward.3} parent=11 // pred_region
        _
      $region16: #{geoclip_forward.3} parent=11 // pred_fallthru
        _
      // Predicated region
      $region17: #{geoclip_forward.3} parent=11 // pred_check
        %p184 = pneg %p119
      $region18: #{geoclip_forward.3} parent=11 // pred_check_branch
        %186 = sbr.rel (%p184) target = $region20
      $region19: #{geoclip_forward.3} parent=11 // pred_region
        _
      $region20: #{geoclip_forward.3} parent=11 // pred_fallthru
        _
      // Predicated region
      $region21: #{geoclip_forward.3} parent=11 // pred_check
        %p187 = pneg %p140
      $region22: #{geoclip_forward.3} parent=11 // pred_check_branch
        %189 = sbr.rel (%p187) target = $region24
      $region23: #{geoclip_forward.3} parent=11 // pred_region
        _
      $region24: #{geoclip_forward.3} parent=11 // pred_fallthru
        _
    $region12: #{geoclip_forward.3} parent=5 // pred_fallthru
      _
    %p190 = scmp.lt.s32.totalorder %s11, 2
    // Predicated region
    $region25: #{geoclip_forward.3} parent=5 // pred_check
      %p191 = pneg %p190
    $region26: #{geoclip_forward.3} parent=5 // pred_check_branch
      %193 = sbr.rel (%p191) target = $region28
    $region27: #{geoclip_forward.3} parent=5 // pred_region
      // Predicated region
      $region29: #{geoclip_forward.3} parent=27 // pred_check
        %p194 = pneg %p45
      $region30: #{geoclip_forward.3} parent=27 // pred_check_branch
        %196 = sbr.rel (%p194) target = $region32
      $region31: #{geoclip_forward.3} parent=27 // pred_region
        %s197 = smul.u32 4, %s19
        %p198 = scmp.lt.s32.totalorder %s18, 0
        %s199 = scalar_select %p198, %s18, 0
        %p200 = scmp.lt.s32.totalorder %s197, 7
        %s201 = scalar_select %p200, %s197, 7
        %s202 = smul.addr %s199, 8
        %s203 = sadd.s32 %s201, %s202
        %s204 = smul.addr %s203, 4
        %s205 = scalar_lea.vmem %s0, %s204
        %s206 = smul.u32 4, %s19
      $region32: #{geoclip_forward.3} parent=27 // pred_fallthru
        _
      // Predicated region
      $region33: #{geoclip_forward.3} parent=27 // pred_check
        %p207 = pneg %p71
      $region34: #{geoclip_forward.3} parent=27 // pred_check_branch
        %209 = sbr.rel (%p207) target = $region36
      $region35: #{geoclip_forward.3} parent=27 // pred_region
        %s210 = smul.u32 64, %s19
        %p211 = scmp.lt.s32.totalorder %s210, 127
        %s212 = scalar_select %p211, %s210, 127
        %s213 = smul.addr %s212, 2
        %s214 = smul.addr %s213, 4
        %s215 = scalar_lea.vmem %s1, %s214
        %s216 = smul.u32 64, %s19
      $region36: #{geoclip_forward.3} parent=27 // pred_fallthru
        _
    $region28: #{geoclip_forward.3} parent=5 // pred_fallthru
      _
    %p217 = scmp.le.s32.totalorder 1, %s11
    %p218 = scmp.lt.s32.totalorder %s11, 3
    %p219 = pnand %p217, %p218
    %p220 = pneg %p219
    // Predicated region
    $region37: #{geoclip_forward.3} parent=5 // pred_check
      _
    $region38: #{geoclip_forward.3} parent=5 // pred_check_branch
      %222 = sbr.rel (%p219) target = $region40
    $region39: #{geoclip_forward.3} parent=5 // pred_region
      %s223 = ssub.s32 %s11, 1
      %s224 = smul.u32 4, %s21
      %p225 = scmp.lt.s32.totalorder %s20, 0
      %s226 = scalar_select %p225, %s20, 0
      %p227 = scmp.lt.s32.totalorder %s224, 7
      %s228 = scalar_select %p227, %s224, 7
      %s229 = smul.addr %s226, 8
      %s230 = sadd.s32 %s228, %s229
      %s231 = smul.addr %s230, 4
      %s232 = scalar_lea.vmem %s0, %s231
      %p233 = pneg %p51
      %p234 = pneg %p48
      %s235 = smul.u32 64, %s21
      %p236 = scmp.lt.s32.totalorder %s235, 127
      %s237 = scalar_select %p236, %s235, 127
      %s238 = smul.addr %s237, 2
      %s239 = smul.addr %s238, 4
      %s240 = scalar_lea.vmem %s1, %s239
      %p241 = pneg %p77
      %p242 = pneg %p74
      %p243 = pneg %p98
      %p244 = pneg %p95
      %p245 = pneg %p119
      %p246 = pneg %p116
      %p247 = pneg %p140
      %p248 = pneg %p137
      %p249 = pneg %p166
      %p250 = pneg %p163
      %p251 = scmp.lt.s32.totalorder %s20, 0
      %s252 = scalar_select %p251, %s20, 0
      %s253 = smul.addr %s252, 8
      %s254 = scalar_lea.vmem %s5, %s253
      %s255 = smul.u32 4, %s21
      %p256 = scmp.lt.s32.totalorder %s20, 0
      %s257 = scalar_select %p256, %s20, 0
      %p258 = scmp.lt.s32.totalorder %s255, 7
      %s259 = scalar_select %p258, %s255, 7
      %s260 = smul.addr %s257, 8
      %s261 = sadd.s32 %s259, %s260
      %s262 = smul.addr %s261, 4
      %s263 = scalar_lea.vmem %s0, %s262
      %s264 = smul.u32 4, %s21
      %s265 = smul.u32 64, %s21
      %p266 = scmp.lt.s32.totalorder %s265, 127
      %s267 = scalar_select %p266, %s265, 127
      %s268 = smul.addr %s267, 2
      %s269 = smul.addr %s268, 4
      %s270 = scalar_lea.vmem %s1, %s269
      %s271 = smul.u32 64, %s21
      %p272 = scmp.lt.s32.totalorder %s20, 0
      %s273 = scalar_select %p272, %s20, 0
      %s274 = smul.addr %s273, 8
      %s275 = scalar_lea.vmem %s5, %s274
      %p277 = scmp.eq.s32.totalorder %s21, 0
      // Predicated region
      $region41: #{geoclip_forward.3} parent=39 // pred_check
        %p278 = pneg %p277
      $region42: #{geoclip_forward.3} parent=39 // pred_check_branch
        %280 = sbr.rel (%p278) target = $region44
      $region43: #{geoclip_forward.3} parent=39 // pred_region
        %281 = vst [vmem:[#allocation2] sm:$0xff] 0.0
        %282 = vst [vmem:[#allocation2 + $0x8] sm:$0xff] 0.0
      $region44: #{geoclip_forward.3} parent=39 // pred_fallthru
        _
      %v283 = vld [vmem:[#allocation2] sm:$0xff]
      %v284 = vld [vmem:[#allocation2 + $0x8] sm:$0xff]
      %v285 = vld [vmem:[%s263] sm:$0xff]
      %v286 = vld [vmem:[%s263 + $0x8] sm:$0xff]
      %v287 = vld [vmem:[%s270] sm:$0xff]
      %v288 = vld [vmem:[%s270 + $0x8] sm:$0xff]
      %v289 = vld [vmem:[%s270 + $0x10] sm:$0xff]
      %v290 = vld [vmem:[%s270 + $0x18] sm:$0xff]
      %v291 = vld [vmem:[%s270 + $0x20] sm:$0xff]
      %v292 = vld [vmem:[%s270 + $0x28] sm:$0xff]
      %v293 = vld [vmem:[%s270 + $0x30] sm:$0xff]
      %v294 = vld [vmem:[%s270 + $0x38] sm:$0xff]
      %v295 = vld [vmem:[%s270 + $0x40] sm:$0xff]
      %v296 = vld [vmem:[%s270 + $0x48] sm:$0xff]
      %v297 = vld [vmem:[%s270 + $0x50] sm:$0xff]
      %v298 = vld [vmem:[%s270 + $0x58] sm:$0xff]
      %v299 = vld [vmem:[%s270 + $0x60] sm:$0xff]
      %v300 = vld [vmem:[%s270 + $0x68] sm:$0xff]
      %v301 = vld [vmem:[%s270 + $0x70] sm:$0xff]
      %v302 = vld [vmem:[%s270 + $0x78] sm:$0xff]
      %v303 = vld [vmem:[%s270 + $0x80] sm:$0xff]
      %v304 = vld [vmem:[%s270 + $0x88] sm:$0xff]
      %v305 = vld [vmem:[%s270 + $0x90] sm:$0xff]
      %v306 = vld [vmem:[%s270 + $0x98] sm:$0xff]
      %v307 = vld [vmem:[%s270 + $0xa0] sm:$0xff]
      %v308 = vld [vmem:[%s270 + $0xa8] sm:$0xff]
      %v309 = vld [vmem:[%s270 + $0xb0] sm:$0xff]
      %v310 = vld [vmem:[%s270 + $0xb8] sm:$0xff]
      %v311 = vld [vmem:[%s270 + $0xc0] sm:$0xff]
      %v312 = vld [vmem:[%s270 + $0xc8] sm:$0xff]
      %v313 = vld [vmem:[%s270 + $0xd0] sm:$0xff]
      %v314 = vld [vmem:[%s270 + $0xd8] sm:$0xff]
      %v315 = vld [vmem:[%s270 + $0xe0] sm:$0xff]
      %v316 = vld [vmem:[%s270 + $0xe8] sm:$0xff]
      %v317 = vld [vmem:[%s270 + $0xf0] sm:$0xff]
      %v318 = vld [vmem:[%s270 + $0xf8] sm:$0xff]
      %v319 = vld [vmem:[%s270 + $0x100] sm:$0xff]
      %v320 = vld [vmem:[%s270 + $0x108] sm:$0xff]
      %v321 = vld [vmem:[%s270 + $0x110] sm:$0xff]
      %v322 = vld [vmem:[%s270 + $0x118] sm:$0xff]
      %v323 = vld [vmem:[%s270 + $0x120] sm:$0xff]
      %v324 = vld [vmem:[%s270 + $0x128] sm:$0xff]
      %v325 = vld [vmem:[%s270 + $0x130] sm:$0xff]
      %v326 = vld [vmem:[%s270 + $0x138] sm:$0xff]
      %v327 = vld [vmem:[%s270 + $0x140] sm:$0xff]
      %v328 = vld [vmem:[%s270 + $0x148] sm:$0xff]
      %v329 = vld [vmem:[%s270 + $0x150] sm:$0xff]
      %v330 = vld [vmem:[%s270 + $0x158] sm:$0xff]
      %v331 = vld [vmem:[%s270 + $0x160] sm:$0xff]
      %v332 = vld [vmem:[%s270 + $0x168] sm:$0xff]
      %v333 = vld [vmem:[%s270 + $0x170] sm:$0xff]
      %v334 = vld [vmem:[%s270 + $0x178] sm:$0xff]
      %v335 = vld [vmem:[%s270 + $0x180] sm:$0xff]
      %v336 = vld [vmem:[%s270 + $0x188] sm:$0xff]
      %v337 = vld [vmem:[%s270 + $0x190] sm:$0xff]
      %v338 = vld [vmem:[%s270 + $0x198] sm:$0xff]
      %v339 = vld [vmem:[%s270 + $0x1a0] sm:$0xff]
      %v340 = vld [vmem:[%s270 + $0x1a8] sm:$0xff]
      %v341 = vld [vmem:[%s270 + $0x1b0] sm:$0xff]
      %v342 = vld [vmem:[%s270 + $0x1b8] sm:$0xff]
      %v343 = vld [vmem:[%s270 + $0x1c0] sm:$0xff]
      %v344 = vld [vmem:[%s270 + $0x1c8] sm:$0xff]
      %v345 = vld [vmem:[%s270 + $0x1d0] sm:$0xff]
      %v346 = vld [vmem:[%s270 + $0x1d8] sm:$0xff]
      %v347 = vld [vmem:[%s270 + $0x1e0] sm:$0xff]
      %v348 = vld [vmem:[%s270 + $0x1e8] sm:$0xff]
      %v349 = vld [vmem:[%s270 + $0x1f0] sm:$0xff]
      %v350 = vld [vmem:[%s270 + $0x1f8] sm:$0xff]
      %v353 = vunpack.c.l.b16 %v285
      %v354 = vunpack.c.h.b16 %v285
      %v355 = vunpack.c.l.b16 %v286
      %v356 = vunpack.c.h.b16 %v286
      %v357 = vpack.c.b16 %v353, %v353
      %v358 = vpack.c.b16 %v354, %v354
      %v359 = vpack.c.b16 %v355, %v355
      %v360 = vpack.c.b16 %v356, %v356
      %v429 = vunpack.c.l.b16 %v287
      %v430 = vunpack.c.h.b16 %v287
      %v431 = vunpack.c.l.b16 %v288
      %v432 = vunpack.c.h.b16 %v288
      %v433 = vunpack.c.l.b16 %v289
      %v434 = vunpack.c.h.b16 %v289
      %v435 = vunpack.c.l.b16 %v290
      %v436 = vunpack.c.h.b16 %v290
      %v437 = vunpack.c.l.b16 %v291
      %v438 = vunpack.c.h.b16 %v291
      %v439 = vunpack.c.l.b16 %v292
      %v440 = vunpack.c.h.b16 %v292
      %v441 = vunpack.c.l.b16 %v293
      %v442 = vunpack.c.h.b16 %v293
      %v443 = vunpack.c.l.b16 %v294
      %v444 = vunpack.c.h.b16 %v294
      %v445 = vunpack.c.l.b16 %v295
      %v446 = vunpack.c.h.b16 %v295
      %v447 = vunpack.c.l.b16 %v296
      %v448 = vunpack.c.h.b16 %v296
      %v449 = vunpack.c.l.b16 %v297
      %v450 = vunpack.c.h.b16 %v297
      %v451 = vunpack.c.l.b16 %v298
      %v452 = vunpack.c.h.b16 %v298
      %v453 = vunpack.c.l.b16 %v299
      %v454 = vunpack.c.h.b16 %v299
      %v455 = vunpack.c.l.b16 %v300
      %v456 = vunpack.c.h.b16 %v300
      %v457 = vunpack.c.l.b16 %v301
      %v458 = vunpack.c.h.b16 %v301
      %v459 = vunpack.c.l.b16 %v302
      %v460 = vunpack.c.h.b16 %v302
      %v461 = vunpack.c.l.b16 %v303
      %v462 = vunpack.c.h.b16 %v303
      %v463 = vunpack.c.l.b16 %v304
      %v464 = vunpack.c.h.b16 %v304
      %v465 = vunpack.c.l.b16 %v305
      %v466 = vunpack.c.h.b16 %v305
      %v467 = vunpack.c.l.b16 %v306
      %v468 = vunpack.c.h.b16 %v306
      %v469 = vunpack.c.l.b16 %v307
      %v470 = vunpack.c.h.b16 %v307
      %v471 = vunpack.c.l.b16 %v308
      %v472 = vunpack.c.h.b16 %v308
      %v473 = vunpack.c.l.b16 %v309
      %v474 = vunpack.c.h.b16 %v309
      %v475 = vunpack.c.l.b16 %v310
      %v476 = vunpack.c.h.b16 %v310
      %v477 = vunpack.c.l.b16 %v311
      %v478 = vunpack.c.h.b16 %v311
      %v479 = vunpack.c.l.b16 %v312
      %v480 = vunpack.c.h.b16 %v312
      %v481 = vunpack.c.l.b16 %v313
      %v482 = vunpack.c.h.b16 %v313
      %v483 = vunpack.c.l.b16 %v314
      %v484 = vunpack.c.h.b16 %v314
      %v485 = vunpack.c.l.b16 %v315
      %v486 = vunpack.c.h.b16 %v315
      %v487 = vunpack.c.l.b16 %v316
      %v488 = vunpack.c.h.b16 %v316
      %v489 = vunpack.c.l.b16 %v317
      %v490 = vunpack.c.h.b16 %v317
      %v491 = vunpack.c.l.b16 %v318
      %v492 = vunpack.c.h.b16 %v318
      %v493 = vunpack.c.l.b16 %v319
      %v494 = vunpack.c.h.b16 %v319
      %v495 = vunpack.c.l.b16 %v320
      %v496 = vunpack.c.h.b16 %v320
      %v497 = vunpack.c.l.b16 %v321
      %v498 = vunpack.c.h.b16 %v321
      %v499 = vunpack.c.l.b16 %v322
      %v500 = vunpack.c.h.b16 %v322
      %v501 = vunpack.c.l.b16 %v323
      %v502 = vunpack.c.h.b16 %v323
      %v503 = vunpack.c.l.b16 %v324
      %v504 = vunpack.c.h.b16 %v324
      %v505 = vunpack.c.l.b16 %v325
      %v506 = vunpack.c.h.b16 %v325
      %v507 = vunpack.c.l.b16 %v326
      %v508 = vunpack.c.h.b16 %v326
      %v509 = vunpack.c.l.b16 %v327
      %v510 = vunpack.c.h.b16 %v327
      %v511 = vunpack.c.l.b16 %v328
      %v512 = vunpack.c.h.b16 %v328
      %v513 = vunpack.c.l.b16 %v329
      %v514 = vunpack.c.h.b16 %v329
      %v515 = vunpack.c.l.b16 %v330
      %v516 = vunpack.c.h.b16 %v330
      %v517 = vunpack.c.l.b16 %v331
      %v518 = vunpack.c.h.b16 %v331
      %v519 = vunpack.c.l.b16 %v332
      %v520 = vunpack.c.h.b16 %v332
      %v521 = vunpack.c.l.b16 %v333
      %v522 = vunpack.c.h.b16 %v333
      %v523 = vunpack.c.l.b16 %v334
      %v524 = vunpack.c.h.b16 %v334
      %v525 = vunpack.c.l.b16 %v335
      %v526 = vunpack.c.h.b16 %v335
      %v527 = vunpack.c.l.b16 %v336
      %v528 = vunpack.c.h.b16 %v336
      %v529 = vunpack.c.l.b16 %v337
      %v530 = vunpack.c.h.b16 %v337
      %v531 = vunpack.c.l.b16 %v338
      %v532 = vunpack.c.h.b16 %v338
      %v533 = vunpack.c.l.b16 %v339
      %v534 = vunpack.c.h.b16 %v339
      %v535 = vunpack.c.l.b16 %v340
      %v536 = vunpack.c.h.b16 %v340
      %v537 = vunpack.c.l.b16 %v341
      %v538 = vunpack.c.h.b16 %v341
      %v539 = vunpack.c.l.b16 %v342
      %v540 = vunpack.c.h.b16 %v342
      %v541 = vunpack.c.l.b16 %v343
      %v542 = vunpack.c.h.b16 %v343
      %v543 = vunpack.c.l.b16 %v344
      %v544 = vunpack.c.h.b16 %v344
      %v545 = vunpack.c.l.b16 %v345
      %v546 = vunpack.c.h.b16 %v345
      %v547 = vunpack.c.l.b16 %v346
      %v548 = vunpack.c.h.b16 %v346
      %v549 = vunpack.c.l.b16 %v347
      %v550 = vunpack.c.h.b16 %v347
      %v551 = vunpack.c.l.b16 %v348
      %v552 = vunpack.c.h.b16 %v348
      %v553 = vunpack.c.l.b16 %v349
      %v554 = vunpack.c.h.b16 %v349
      %v555 = vunpack.c.l.b16 %v350
      %v556 = vunpack.c.h.b16 %v350
      %v557 = vpack.c.b16 %v431, %v429
      %v558 = vpack.c.b16 %v432, %v430
      %v559 = vpack.c.b16 %v435, %v433
      %v560 = vpack.c.b16 %v436, %v434
      %v561 = vpack.c.b16 %v439, %v437
      %v562 = vpack.c.b16 %v440, %v438
      %v563 = vpack.c.b16 %v443, %v441
      %v564 = vpack.c.b16 %v444, %v442
      %v565 = vpack.c.b16 %v447, %v445
      %v566 = vpack.c.b16 %v448, %v446
      %v567 = vpack.c.b16 %v451, %v449
      %v568 = vpack.c.b16 %v452, %v450
      %v569 = vpack.c.b16 %v455, %v453
      %v570 = vpack.c.b16 %v456, %v454
      %v571 = vpack.c.b16 %v459, %v457
      %v572 = vpack.c.b16 %v460, %v458
      %v573 = vpack.c.b16 %v463, %v461
      %v574 = vpack.c.b16 %v464, %v462
      %v575 = vpack.c.b16 %v467, %v465
      %v576 = vpack.c.b16 %v468, %v466
      %v577 = vpack.c.b16 %v471, %v469
      %v578 = vpack.c.b16 %v472, %v470
      %v579 = vpack.c.b16 %v475, %v473
      %v580 = vpack.c.b16 %v476, %v474
      %v581 = vpack.c.b16 %v479, %v477
      %v582 = vpack.c.b16 %v480, %v478
      %v583 = vpack.c.b16 %v483, %v481
      %v584 = vpack.c.b16 %v484, %v482
      %v585 = vpack.c.b16 %v487, %v485
      %v586 = vpack.c.b16 %v488, %v486
      %v587 = vpack.c.b16 %v491, %v489
      %v588 = vpack.c.b16 %v492, %v490
      %v589 = vpack.c.b16 %v495, %v493
      %v590 = vpack.c.b16 %v496, %v494
      %v591 = vpack.c.b16 %v499, %v497
      %v592 = vpack.c.b16 %v500, %v498
      %v593 = vpack.c.b16 %v503, %v501
      %v594 = vpack.c.b16 %v504, %v502
      %v595 = vpack.c.b16 %v507, %v505
      %v596 = vpack.c.b16 %v508, %v506
      %v597 = vpack.c.b16 %v511, %v509
      %v598 = vpack.c.b16 %v512, %v510
      %v599 = vpack.c.b16 %v515, %v513
      %v600 = vpack.c.b16 %v516, %v514
      %v601 = vpack.c.b16 %v519, %v517
      %v602 = vpack.c.b16 %v520, %v518
      %v603 = vpack.c.b16 %v523, %v521
      %v604 = vpack.c.b16 %v524, %v522
      %v605 = vpack.c.b16 %v527, %v525
      %v606 = vpack.c.b16 %v528, %v526
      %v607 = vpack.c.b16 %v531, %v529
      %v608 = vpack.c.b16 %v532, %v530
      %v609 = vpack.c.b16 %v535, %v533
      %v610 = vpack.c.b16 %v536, %v534
      %v611 = vpack.c.b16 %v539, %v537
      %v612 = vpack.c.b16 %v540, %v538
      %v613 = vpack.c.b16 %v543, %v541
      %v614 = vpack.c.b16 %v544, %v542
      %v615 = vpack.c.b16 %v547, %v545
      %v616 = vpack.c.b16 %v548, %v546
      %v617 = vpack.c.b16 %v551, %v549
      %v618 = vpack.c.b16 %v552, %v550
      %v619 = vpack.c.b16 %v555, %v553
      %v620 = vpack.c.b16 %v556, %v554
      %685 = vmatprep.subr.bf16.mxu0 %v558
      %686 = vmatpush1.bf16.msra.mxu0 %v557
      %687 = vmatprep.subr.bf16.mxu0 %v560
      %688 = vmatpush1.bf16.msra.mxu0 %v559
      %689 = vmatprep.subr.bf16.mxu0 %v562
      %690 = vmatpush1.bf16.msra.mxu0 %v561
      %691 = vmatprep.subr.bf16.mxu0 %v564
      %692 = vmatpush1.bf16.msra.mxu0 %v563
      %693 = vmatprep.subr.bf16.mxu0 %v566
      %694 = vmatpush1.bf16.msra.mxu0 %v565
      %695 = vmatprep.subr.bf16.mxu0 %v568
      %696 = vmatpush1.bf16.msra.mxu0 %v567
      %697 = vmatprep.subr.bf16.mxu0 %v570
      %698 = vmatpush1.bf16.msra.mxu0 %v569
      %699 = vmatprep.subr.bf16.mxu0 %v572
      %700 = vmatpush1.bf16.msra.mxu0 %v571
      %701 = vmatprep.subr.bf16.mxu0 %v574
      %702 = vmatpush1.bf16.msra.mxu0 %v573
      %703 = vmatprep.subr.bf16.mxu0 %v576
      %704 = vmatpush1.bf16.msra.mxu0 %v575
      %705 = vmatprep.subr.bf16.mxu0 %v578
      %706 = vmatpush1.bf16.msra.mxu0 %v577
      %707 = vmatprep.subr.bf16.mxu0 %v580
      %708 = vmatpush1.bf16.msra.mxu0 %v579
      %709 = vmatprep.subr.bf16.mxu0 %v582
      %710 = vmatpush1.bf16.msra.mxu0 %v581
      %711 = vmatprep.subr.bf16.mxu0 %v584
      %712 = vmatpush1.bf16.msra.mxu0 %v583
      %713 = vmatprep.subr.bf16.mxu0 %v586
      %714 = vmatpush1.bf16.msra.mxu0 %v585
      %715 = vmatprep.subr.bf16.mxu0 %v588
      %716 = vmatpush1.bf16.msra.mxu0 %v587
      %717 = vmatprep.mubr.bf16.mxu0 %v358
      %718 = vmatmul.mubr.bf16.gmra.mrb[0].mxu0 %v357
      %v719 = vpop.f32.mrb[0].mxu0
      %v720 = vadd.f32 0.0, %v719
      %v721 = vpop.f32.mrb[0].mxu0
      %v722 = vadd.f32 0.0, %v721
      %v723 = vpop.f32.mrb[0].mxu0
      %v724 = vpop.f32.mrb[0].mxu0
      %725 = vdwg.mxu0
      %726 = vmatprep.subr.bf16.mxu0 %v590
      %727 = vmatpush1.bf16.msra.mxu0 %v589
      %728 = vmatprep.subr.bf16.mxu0 %v592
      %729 = vmatpush1.bf16.msra.mxu0 %v591
      %730 = vmatprep.subr.bf16.mxu0 %v594
      %731 = vmatpush1.bf16.msra.mxu0 %v593
      %732 = vmatprep.subr.bf16.mxu0 %v596
      %733 = vmatpush1.bf16.msra.mxu0 %v595
      %734 = vmatprep.subr.bf16.mxu0 %v598
      %735 = vmatpush1.bf16.msra.mxu0 %v597
      %736 = vmatprep.subr.bf16.mxu0 %v600
      %737 = vmatpush1.bf16.msra.mxu0 %v599
      %738 = vmatprep.subr.bf16.mxu0 %v602
      %739 = vmatpush1.bf16.msra.mxu0 %v601
      %740 = vmatprep.subr.bf16.mxu0 %v604
      %741 = vmatpush1.bf16.msra.mxu0 %v603
      %742 = vmatprep.subr.bf16.mxu0 %v606
      %743 = vmatpush1.bf16.msra.mxu0 %v605
      %744 = vmatprep.subr.bf16.mxu0 %v608
      %745 = vmatpush1.bf16.msra.mxu0 %v607
      %746 = vmatprep.subr.bf16.mxu0 %v610
      %747 = vmatpush1.bf16.msra.mxu0 %v609
      %748 = vmatprep.subr.bf16.mxu0 %v612
      %749 = vmatpush1.bf16.msra.mxu0 %v611
      %750 = vmatprep.subr.bf16.mxu0 %v614
      %751 = vmatpush1.bf16.msra.mxu0 %v613
      %752 = vmatprep.subr.bf16.mxu0 %v616
      %753 = vmatpush1.bf16.msra.mxu0 %v615
      %754 = vmatprep.subr.bf16.mxu0 %v618
      %755 = vmatpush1.bf16.msra.mxu0 %v617
      %756 = vmatprep.subr.bf16.mxu0 %v620
      %757 = vmatpush1.bf16.msra.mxu0 %v619
      %758 = vmatprep.mubr.bf16.mxu0 %v360
      %759 = vmatmul.mubr.bf16.gmra.mrb[0].mxu0 %v359
      %v760 = vpop.f32.mrb[0].mxu0
      %v761 = vadd.f32 %v720, %v760
      %v762 = vpop.f32.mrb[0].mxu0
      %v763 = vadd.f32 %v722, %v762
      %v764 = vpop.f32.mrb[0].mxu0
      %v765 = vpop.f32.mrb[0].mxu0
      %766 = vdwg.mxu0
      %v767 = vadd.f32 %v283, %v761
      %v768 = vadd.f32 %v284, %v763
      %769 = vst [vmem:[#allocation2] sm:$0xff] %v767
      %770 = vst [vmem:[#allocation2 + $0x8] sm:$0xff] %v768
      %p771 = scmp.eq.s32.totalorder %s21, 1
      // Predicated region
      $region45: #{geoclip_forward.3} parent=39 // pred_check
        %p772 = pneg %p771
      $region46: #{geoclip_forward.3} parent=39 // pred_check_branch
        %774 = sbr.rel (%p772) target = $region48
      $region47: #{geoclip_forward.3} parent=39 // pred_region
        %v775 = vld [vmem:[#allocation2] sm:$0xff]
        %v776 = vld [vmem:[#allocation2 + $0x8] sm:$0xff]
        %v777 = vld [vmem:[%s2] sm:$0x3]
        %v779 = vlaneseq
        %v780 = vshrl.u32 %v779, 7
        %v781 = vsub.s32 0, %v780
        %v782 = vrot.slane %v777, %v781
        %v783 = vlaneseq
        %v784 = vshrl.u32 %v783, 7
        %v785 = vsub.s32 1, %v784
        %v786 = vrot.slane %v777, %v785
        %v789 = vadd.f32 %v775, %v782
        %v790 = vadd.f32 %v776, %v786
        %v791 = vmax.f32 %v789, 0.0
        %v792 = vmax.f32 %v790, 0.0
        %v793 = vpack.c.bf16 %v791, %v791
        %v794 = vpack.c.bf16 %v792, %v792
        %v795 = vld [vmem:[%s3] sm:$0xf]
        %v796 = vld [vmem:[%s3 + $0x4] sm:$0xf]
        %v797 = vld [vmem:[%s3 + $0x8] sm:$0xf]
        %v798 = vld [vmem:[%s3 + $0xc] sm:$0xf]
        %v799 = vld [vmem:[%s3 + $0x10] sm:$0xf]
        %v800 = vld [vmem:[%s3 + $0x14] sm:$0xf]
        %v801 = vld [vmem:[%s3 + $0x18] sm:$0xf]
        %v802 = vld [vmem:[%s3 + $0x1c] sm:$0xf]
        %v803 = vld [vmem:[%s3 + $0x20] sm:$0xf]
        %v804 = vld [vmem:[%s3 + $0x24] sm:$0xf]
        %v805 = vld [vmem:[%s3 + $0x28] sm:$0xf]
        %v806 = vld [vmem:[%s3 + $0x2c] sm:$0xf]
        %v807 = vld [vmem:[%s3 + $0x30] sm:$0xf]
        %v808 = vld [vmem:[%s3 + $0x34] sm:$0xf]
        %v809 = vld [vmem:[%s3 + $0x38] sm:$0xf]
        %v810 = vld [vmem:[%s3 + $0x3c] sm:$0xf]
        %v811 = vld [vmem:[%s3 + $0x40] sm:$0xf]
        %v812 = vld [vmem:[%s3 + $0x44] sm:$0xf]
        %v813 = vld [vmem:[%s3 + $0x48] sm:$0xf]
        %v814 = vld [vmem:[%s3 + $0x4c] sm:$0xf]
        %v815 = vld [vmem:[%s3 + $0x50] sm:$0xf]
        %v816 = vld [vmem:[%s3 + $0x54] sm:$0xf]
        %v817 = vld [vmem:[%s3 + $0x58] sm:$0xf]
        %v818 = vld [vmem:[%s3 + $0x5c] sm:$0xf]
        %v819 = vld [vmem:[%s3 + $0x60] sm:$0xf]
        %v820 = vld [vmem:[%s3 + $0x64] sm:$0xf]
        %v821 = vld [vmem:[%s3 + $0x68] sm:$0xf]
        %v822 = vld [vmem:[%s3 + $0x6c] sm:$0xf]
        %v823 = vld [vmem:[%s3 + $0x70] sm:$0xf]
        %v824 = vld [vmem:[%s3 + $0x74] sm:$0xf]
        %v825 = vld [vmem:[%s3 + $0x78] sm:$0xf]
        %v826 = vld [vmem:[%s3 + $0x7c] sm:$0xf]
        %v827 = vld [vmem:[%s4] sm:$0x1]
        %v829 = vlaneseq
        %v830 = vshrl.u32 %v829, 7
        %v831 = vsub.s32 0, %v830
        %v832 = vrot.slane %v827, %v831
        %v866 = vunpack.c.l.b16 %v795
        %v867 = vunpack.c.l.b16 %v796
        %v868 = vunpack.c.l.b16 %v797
        %v869 = vunpack.c.l.b16 %v798
        %v870 = vunpack.c.l.b16 %v799
        %v871 = vunpack.c.l.b16 %v800
        %v872 = vunpack.c.l.b16 %v801
        %v873 = vunpack.c.l.b16 %v802
        %v874 = vunpack.c.l.b16 %v803
        %v875 = vunpack.c.l.b16 %v804
        %v876 = vunpack.c.l.b16 %v805
        %v877 = vunpack.c.l.b16 %v806
        %v878 = vunpack.c.l.b16 %v807
        %v879 = vunpack.c.l.b16 %v808
        %v880 = vunpack.c.l.b16 %v809
        %v881 = vunpack.c.l.b16 %v810
        %v882 = vunpack.c.l.b16 %v811
        %v883 = vunpack.c.l.b16 %v812
        %v884 = vunpack.c.l.b16 %v813
        %v885 = vunpack.c.l.b16 %v814
        %v886 = vunpack.c.l.b16 %v815
        %v887 = vunpack.c.l.b16 %v816
        %v888 = vunpack.c.l.b16 %v817
        %v889 = vunpack.c.l.b16 %v818
        %v890 = vunpack.c.l.b16 %v819
        %v891 = vunpack.c.l.b16 %v820
        %v892 = vunpack.c.l.b16 %v821
        %v893 = vunpack.c.l.b16 %v822
        %v894 = vunpack.c.l.b16 %v823
        %v895 = vunpack.c.l.b16 %v824
        %v896 = vunpack.c.l.b16 %v825
        %v897 = vunpack.c.l.b16 %v826
        %v898 = vpack.c.b16 %v867, %v866
        %v899 = vpack.c.b16 %v869, %v868
        %v900 = vpack.c.b16 %v871, %v870
        %v901 = vpack.c.b16 %v873, %v872
        %v902 = vpack.c.b16 %v875, %v874
        %v903 = vpack.c.b16 %v877, %v876
        %v904 = vpack.c.b16 %v879, %v878
        %v905 = vpack.c.b16 %v881, %v880
        %v906 = vpack.c.b16 %v883, %v882
        %v907 = vpack.c.b16 %v885, %v884
        %v908 = vpack.c.b16 %v887, %v886
        %v909 = vpack.c.b16 %v889, %v888
        %v910 = vpack.c.b16 %v891, %v890
        %v911 = vpack.c.b16 %v893, %v892
        %v912 = vpack.c.b16 %v895, %v894
        %v913 = vpack.c.b16 %v897, %v896
        %930 = vmatprep.subr.bf16.mxu0 0
        %931 = vmatpush1.bf16.msra.mxu0 %v898
        %932 = vmatprep.subr.bf16.mxu0 0
        %933 = vmatpush1.bf16.msra.mxu0 %v899
        %934 = vmatprep.subr.bf16.mxu0 0
        %935 = vmatpush1.bf16.msra.mxu0 %v900
        %936 = vmatprep.subr.bf16.mxu0 0
        %937 = vmatpush1.bf16.msra.mxu0 %v901
        %938 = vmatprep.subr.bf16.mxu0 0
        %939 = vmatpush1.bf16.msra.mxu0 %v902
        %940 = vmatprep.subr.bf16.mxu0 0
        %941 = vmatpush1.bf16.msra.mxu0 %v903
        %942 = vmatprep.subr.bf16.mxu0 0
        %943 = vmatpush1.bf16.msra.mxu0 %v904
        %944 = vmatprep.subr.bf16.mxu0 0
        %945 = vmatpush1.bf16.msra.mxu0 %v905
        %946 = vmatprep.subr.bf16.mxu0 0
        %947 = vmatpush1.bf16.msra.mxu0 %v906
        %948 = vmatprep.subr.bf16.mxu0 0
        %949 = vmatpush1.bf16.msra.mxu0 %v907
        %950 = vmatprep.subr.bf16.mxu0 0
        %951 = vmatpush1.bf16.msra.mxu0 %v908
        %952 = vmatprep.subr.bf16.mxu0 0
        %953 = vmatpush1.bf16.msra.mxu0 %v909
        %954 = vmatprep.subr.bf16.mxu0 0
        %955 = vmatpush1.bf16.msra.mxu0 %v910
        %956 = vmatprep.subr.bf16.mxu0 0
        %957 = vmatpush1.bf16.msra.mxu0 %v911
        %958 = vmatprep.subr.bf16.mxu0 0
        %959 = vmatpush1.bf16.msra.mxu0 %v912
        %960 = vmatprep.subr.bf16.mxu0 0
        %961 = vmatpush1.bf16.msra.mxu0 %v913
        %962 = vmatprep.mubr.bf16.mxu0 %v794
        %963 = vmatmul.mubr.bf16.gmra.mrb[0].mxu0 %v793
        %v964 = vpop.f32.mrb[0].mxu0
        %v965 = vadd.f32 %v832, %v964
        %v966 = vpop.f32.mrb[0].mxu0
        %v967 = vpop.f32.mrb[0].mxu0
        %v968 = vpop.f32.mrb[0].mxu0
        %969 = vdwg.mxu0
        %970 = vst [vmem:[%s275] sm:$0xff] %v965
      $region48: #{geoclip_forward.3} parent=39 // pred_fallthru
        _
      %p971 = scmp.lt.s32.totalorder %s20, 0
      %s972 = scalar_select %p971, %s20, 0
      %s973 = smul.addr %s972, 8
      %s974 = scalar_lea.vmem %s5, %s973
      // Predicated region
      $region49: #{geoclip_forward.3} parent=39 // pred_check
        %p975 = pneg %p163
      $region50: #{geoclip_forward.3} parent=39 // pred_check_branch
        %977 = sbr.rel (%p975) target = $region52
      $region51: #{geoclip_forward.3} parent=39 // pred_region
        _
      $region52: #{geoclip_forward.3} parent=39 // pred_fallthru
        _
      // Predicated region
      $region53: #{geoclip_forward.3} parent=39 // pred_check
        %p978 = pneg %p163
      $region54: #{geoclip_forward.3} parent=39 // pred_check_branch
        %980 = sbr.rel (%p978) target = $region56
      $region55: #{geoclip_forward.3} parent=39 // pred_region
        %p981 = scmp.lt.s32.totalorder %s20, 0
        %s982 = scalar_select %p981, %s20, 0
        %s983 = smul.addr %s982, 8
        %s984 = scalar_lea.vmem %s5, %s983
      $region56: #{geoclip_forward.3} parent=39 // pred_fallthru
        _
    $region40: #{geoclip_forward.3} parent=5 // pred_fallthru
      _
    %p985 = scmp.le.s32.totalorder 2, %s11
    // Predicated region
    $region57: #{geoclip_forward.3} parent=5 // pred_check
      %p986 = pneg %p985
    $region58: #{geoclip_forward.3} parent=5 // pred_check_branch
      %988 = sbr.rel (%p986) target = $region60
    $region59: #{geoclip_forward.3} parent=5 // pred_region
      %s989 = ssub.s32 %s11, 2
    $region60: #{geoclip_forward.3} parent=5 // pred_fallthru
      _
  $region6: #{geoclip_forward.3} parent=0 // loop_footer
    %s15 = sadd.s32 1, %s11
  $region7: #{geoclip_forward.3} parent=0 // loop_footer_branch
    %10 = sbr.rel target = $region3
  $region8: #{geoclip_forward.3} parent=0 // loop_exit
    _

</llo_original>
